<compile_context>
chip_gen: v7x
topology: tpu7x:2x2x1
jax: 0.10.0
libtpu: 0.0.40
codegen_flags: <defaults>
</compile_context>

<pallas_src>
import functools

import jax
import jax.numpy as jnp
from jax import lax
from jax.experimental import pallas as pl
from jax.experimental.pallas import tpu as pltpu


def _round_up(v, m):
    return ((v + m - 1) // m) * m


def _shift_rows(a, d, T):
    """win[t, :] = a[t + d, :], zero-filled outside [0, T).  Pure vreg op (sublane shift)."""
    if d == 0:
        return a
    z = jnp.zeros((abs(d), a.shape[1]), a.dtype)
    if d > 0:
        return jnp.concatenate([a[d:, :], z], axis=0)
    return jnp.concatenate([z, a[: T + d, :]], axis=0)


def block_kernel(x_ref, w1_ref, b1_ref, w2_ref, b2_ref, w3_ref, b3_ref,
                 w4_ref, b4_ref, fcw_ref, fcb_ref, out_ref, *, c, k, T):
    p = (k - 1) // 2
    x = x_ref[...]                                            # (T, Bt), batch on lanes

    # ---------------- conv1d_1 (1 -> c) + ReLU : VPU broadcast path ----------
    xwin = [_shift_rows(x, j - p, T) for j in range(k)]       # k taps, built once
    h = []                                                    # list of c (T, Bt) values
    for co in range(c):
        acc = xwin[0] * w1_ref[co * k]
        for j in range(1, k):
            acc = acc + xwin[j] * w1_ref[co * k + j]
        h.append(jnp.maximum(acc + b1_ref[co], 0.0))

    # ---------------- conv1d_{2,3,4} residual blocks (c -> c) + ReLU ---------
    for w_ref, b_ref in ((w2_ref, b2_ref), (w3_ref, b3_ref), (w4_ref, b4_ref)):
        acc = [None] * c
        for ci in range(c):                                   # taps per input channel,
            wins = [_shift_rows(h[ci], j - p, T) for j in range(k)]   # built once
            for co in range(c):
                for j in range(k):
                    term = wins[j] * w_ref[(co * c + ci) * k + j]
                    acc[co] = term if acc[co] is None else acc[co] + term
        # residual add before ReLU, as in the reference
        h = [jnp.maximum(acc[co] + b_ref[co] + h[co], 0.0) for co in range(c)]

    # ---------------- fused FC heads: one (2T, c*T) @ (c*T, Bt) MXU matmul ---
    # channel-major concat along sublanes == x.view(B, -1) (transposed)
    hflat = jnp.concatenate(h, axis=0)                        # (c*T, Bt)
    out_ref[...] = (jnp.dot(fcw_ref[...], hflat,
                            preferred_element_type=jnp.float32)
                    + fcb_ref[...])                           # (2T, Bt), lane-dense store


def block_forward(x, params, *, c, k, T, batch_tile=256):
    assert k % 2 == 1, "padding=(k-1)//2 only gives 'same' length conv for odd k"
    B = x.shape[0]
    assert x.shape == (B, 1, T)

    # ---- batch tiling: batch on the lane axis, tile a multiple of 128 -------
    Bt = min(_round_up(batch_tile, 128), _round_up(max(B, 1), 128))
    Bp = _round_up(B, Bt)
    # keep >= 2 grid steps when the batch spans more than one lane tile (v7x: 2 TCs)
    if Bp > 128 and Bp // Bt < 2:
        Bt = max(128, (Bp // 2) // 128 * 128)
        Bp = _round_up(B, Bt)

    # ---- input / parameter re-layout only (no compute) ----------------------
    xt = jnp.zeros((T, Bp), jnp.float32)
    xt = xt.at[:, :B].set(jnp.transpose(x.reshape(B, T).astype(jnp.float32)))

    w1 = params["conv1_w"].reshape(c * k).astype(jnp.float32)           # [co*k + j]
    b1 = params["conv1_b"].reshape(c).astype(jnp.float32)
    conv_w = [params[f"conv{i}_w"].reshape(c * c * k).astype(jnp.float32)
              for i in (2, 3, 4)]                                        # [(co*c+ci)*k + j]
    conv_b = [params[f"conv{i}_b"].reshape(c).astype(jnp.float32) for i in (2, 3, 4)]
    fcw = jnp.concatenate([params["fc1_w"], params["fc2_w"]],
                          axis=0).astype(jnp.float32)                    # (2T, c*T)
    fcb = jnp.concatenate([params["fc1_b"], params["fc2_b"]],
                          axis=0).reshape(2 * T, 1).astype(jnp.float32)  # (2T, 1)

    smem = pl.BlockSpec(memory_space=pltpu.MemorySpace.SMEM)
    kernel = functools.partial(block_kernel, c=c, k=k, T=T)

    flops = 2 * Bp * (k * c * T + 3 * k * c * c * T + c * T * 2 * T)
    bytes_accessed = 4 * (Bp * T + Bp * 2 * T + 2 * T * c * T + 2 * T
                          + c * k + 3 * c * c * k + 4 * c)
    cost = pl.CostEstimate(flops=flops, transcendentals=0,
                           bytes_accessed=bytes_accessed)

    # per-generation VMEM cap (v7x: 64 MiB physical, v5e/v6e: 128 MiB)
    try:
        vmem_cap = int(getattr(pltpu.get_tpu_info(), "vmem_capacity_bytes", 64 * 2 ** 20))
    except Exception:
        vmem_cap = 64 * 2 ** 20
    est_vmem = 4 * (2 * Bt * T          # x tile, double-buffered
                    + 2 * Bt * 2 * T    # output tile, double-buffered
                    + 2 * T * c * T     # resident fused FC weight
                    + 2 * T)            # bias
    vmem_limit = int(max(16 * 2 ** 20, min(vmem_cap // 2, 4 * est_vmem)))

    out = pl.pallas_call(
        kernel,
        out_shape=jax.ShapeDtypeStruct((2 * T, Bp), jnp.float32),
        grid_spec=pltpu.PrefetchScalarGridSpec(
            num_scalar_prefetch=0,
            grid=(Bp // Bt,),
            in_specs=[
                pl.BlockSpec((T, Bt), lambda b: (0, b)),       # x tile (batch on lanes)
                smem, smem,                                    # conv1 w/b (SMEM scalars)
                smem, smem,                                    # conv2
                smem, smem,                                    # conv3
                smem, smem,                                    # conv4
                pl.BlockSpec((2 * T, c * T), lambda b: (0, 0)),  # fused FC weight (resident)
                pl.BlockSpec((2 * T, 1), lambda b: (0, 0)),      # fused FC bias
            ],
            out_specs=pl.BlockSpec((2 * T, Bt), lambda b: (0, b)),
        ),
        compiler_params=pltpu.CompilerParams(
            dimension_semantics=("parallel",),
            vmem_limit_bytes=vmem_limit),
        cost_estimate=cost,
    )(xt, w1, b1, conv_w[0], conv_b[0], conv_w[1], conv_b[1],
      conv_w[2], conv_b[2], fcw, fcb)

    signal = jnp.transpose(out[:T, :B]).reshape(B, 1, T)
    noise = jnp.transpose(out[T:, :B]).reshape(B, 1, T)
    return signal, noise


def block_reference(x, params, *, c, k, T):
    """Pure-JAX reference matching the PyTorch forward."""
    p = (k - 1) // 2

    def conv1d(h, w, b):
        out = lax.conv_general_dilated(
            h, w, window_strides=(1,), padding=[(p, p)],
            dimension_numbers=("NCH", "OIH", "NCH"))
        return out + b[None, :, None]

    h = jax.nn.relu(conv1d(x, params["conv1_w"], params["conv1_b"]))
    for i in (2, 3, 4):
        h = jax.nn.relu(conv1d(h, params[f"conv{i}_w"], params[f"conv{i}_b"]) + h)
    flat = h.reshape(h.shape[0], -1)
    signal = (flat @ params["fc1_w"].T + params["fc1_b"])[:, None, :]
    noise = (flat @ params["fc2_w"].T + params["fc2_b"])[:, None, :]
    return signal, noise


def init_params(key, *, c, k, T):
    keys = jax.random.split(key, 12)
    p = {}
    p["conv1_w"] = 0.2 * jax.random.normal(keys[0], (c, 1, k), jnp.float32)
    p["conv1_b"] = 0.1 * jax.random.normal(keys[1], (c,), jnp.float32)
    p["conv2_w"] = 0.2 * jax.random.normal(keys[2], (c, c, k), jnp.float32)
    p["conv2_b"] = 0.1 * jax.random.normal(keys[3], (c,), jnp.float32)
    p["conv3_w"] = 0.2 * jax.random.normal(keys[4], (c, c, k), jnp.float32)
    p["conv3_b"] = 0.1 * jax.random.normal(keys[5], (c,), jnp.float32)
    p["conv4_w"] = 0.2 * jax.random.normal(keys[6], (c, c, k), jnp.float32)
    p["conv4_b"] = 0.1 * jax.random.normal(keys[7], (c,), jnp.float32)
    p["fc1_w"] = 0.1 * jax.random.normal(keys[8], (T, c * T), jnp.float32)
    p["fc1_b"] = 0.1 * jax.random.normal(keys[9], (T,), jnp.float32)
    p["fc2_w"] = 0.1 * jax.random.normal(keys[10], (T, c * T), jnp.float32)
    p["fc2_b"] = 0.1 * jax.random.normal(keys[11], (T,), jnp.float32)
    return p


if __name__ == "__main__":
    B, c, k, T = 2, 4, 3, 16
    key = jax.random.PRNGKey(0)
    key_x, key_p = jax.random.split(key)

    x = jax.random.normal(key_x, (B, 1, T), jnp.float32)   # PyTorch NCL input
    params = init_params(key_p, c=c, k=k, T=T)

    signal, noise = block_forward(x, params, c=c, k=k, T=T)
    signal = jax.block_until_ready(signal)
    noise = jax.block_until_ready(noise)

    sig_ref, noi_ref = block_reference(x, params, c=c, k=k, T=T)
    assert signal.shape == (B, 1, T) and noise.shape == (B, 1, T)
    assert jnp.allclose(signal, sig_ref, rtol=1e-4, atol=1e-4)
    assert jnp.allclose(noise, noi_ref, rtol=1e-4, atol=1e-4)

    print("KERNEL_OK")
</pallas_src>

<mosaic_0001>
module attributes {stable_mosaic.version = 11 : i64} {
  func.func @block_kernel(%arg0: i32, %arg1: memref<16x128xf32, #tpu.memory_space<vmem>>, %arg2: memref<12xf32, #tpu.memory_space<smem>>, %arg3: memref<4xf32, #tpu.memory_space<smem>>, %arg4: memref<48xf32, #tpu.memory_space<smem>>, %arg5: memref<4xf32, #tpu.memory_space<smem>>, %arg6: memref<48xf32, #tpu.memory_space<smem>>, %arg7: memref<4xf32, #tpu.memory_space<smem>>, %arg8: memref<48xf32, #tpu.memory_space<smem>>, %arg9: memref<4xf32, #tpu.memory_space<smem>>, %arg10: memref<32x64xf32, #tpu.memory_space<vmem>>, %arg11: memref<32x1xf32, #tpu.memory_space<vmem>>, %arg12: memref<32x128xf32, #tpu.memory_space<vmem>>) attributes {dimension_semantics = [#tpu.dimension_semantics<parallel>], iteration_bounds = array<i64: 1>, scalar_prefetch = 0 : i64, scratch_operands = 0 : i64, tpu.core_type = #tpu.core_type<tc>, window_params = [{transform_indices = @transform_0, window_bounds = array<i64: 16, 128>}, {transform_indices = @transform_1, window_bounds = array<i64: 12>}, {transform_indices = @transform_2, window_bounds = array<i64: 4>}, {transform_indices = @transform_3, window_bounds = array<i64: 48>}, {transform_indices = @transform_4, window_bounds = array<i64: 4>}, {transform_indices = @transform_5, window_bounds = array<i64: 48>}, {transform_indices = @transform_6, window_bounds = array<i64: 4>}, {transform_indices = @transform_7, window_bounds = array<i64: 48>}, {transform_indices = @transform_8, window_bounds = array<i64: 4>}, {pipeline_mode = #tpu.pipeline_mode<synchronous>, transform_indices = @transform_9, window_bounds = array<i64: 32, 64>}, {pipeline_mode = #tpu.pipeline_mode<synchronous>, transform_indices = @transform_10, window_bounds = array<i64: 32, 1>}, {transform_indices = @transform_11, window_bounds = array<i64: 32, 128>}]} {
    %c0 = arith.constant 0 : index
    %c0_0 = arith.constant 0 : index
    %0 = vector.load %arg1[%c0, %c0_0] : memref<16x128xf32, #tpu.memory_space<vmem>>, vector<16x128xf32>
    %cst = arith.constant 0.000000e+00 : f32
    %1 = vector.broadcast %cst : f32 to vector<1x128xf32>
    %2 = vector.extract_strided_slice %0 {offsets = [0, 0], sizes = [15, 128], strides = [1, 1]} : vector<16x128xf32> to vector<15x128xf32>
    %3 = tpu.concatenate %1, %2 in 0 : vector<1x128xf32>, vector<15x128xf32> -> vector<16x128xf32>
    %cst_1 = arith.constant 0.000000e+00 : f32
    %4 = vector.broadcast %cst_1 : f32 to vector<1x128xf32>
    %5 = vector.extract_strided_slice %0 {offsets = [1, 0], sizes = [15, 128], strides = [1, 1]} : vector<16x128xf32> to vector<15x128xf32>
    %6 = tpu.concatenate %5, %4 in 0 : vector<15x128xf32>, vector<1x128xf32> -> vector<16x128xf32>
    %c0_2 = arith.constant 0 : index
    %7 = memref.load %arg2[%c0_2] : memref<12xf32, #tpu.memory_space<smem>>
    %8 = vector.broadcast %7 : f32 to vector<16x128xf32>
    %9 = arith.mulf %3, %8 : vector<16x128xf32>
    %c1 = arith.constant 1 : index
    %10 = memref.load %arg2[%c1] : memref<12xf32, #tpu.memory_space<smem>>
    %11 = vector.broadcast %10 : f32 to vector<16x128xf32>
    %12 = arith.mulf %0, %11 : vector<16x128xf32>
    %13 = arith.addf %9, %12 : vector<16x128xf32>
    %c2 = arith.constant 2 : index
    %14 = memref.load %arg2[%c2] : memref<12xf32, #tpu.memory_space<smem>>
    %15 = vector.broadcast %14 : f32 to vector<16x128xf32>
    %16 = arith.mulf %6, %15 : vector<16x128xf32>
    %17 = arith.addf %13, %16 : vector<16x128xf32>
    %c0_3 = arith.constant 0 : index
    %18 = memref.load %arg3[%c0_3] : memref<4xf32, #tpu.memory_space<smem>>
    %19 = vector.broadcast %18 : f32 to vector<16x128xf32>
    %20 = arith.addf %17, %19 : vector<16x128xf32>
    %cst_4 = arith.constant 0.000000e+00 : f32
    %21 = vector.broadcast %cst_4 : f32 to vector<16x128xf32>
    %22 = arith.maximumf %20, %21 : vector<16x128xf32>
    %c3 = arith.constant 3 : index
    %23 = memref.load %arg2[%c3] : memref<12xf32, #tpu.memory_space<smem>>
    %24 = vector.broadcast %23 : f32 to vector<16x128xf32>
    %25 = arith.mulf %3, %24 : vector<16x128xf32>
    %c4 = arith.constant 4 : index
    %26 = memref.load %arg2[%c4] : memref<12xf32, #tpu.memory_space<smem>>
    %27 = vector.broadcast %26 : f32 to vector<16x128xf32>
    %28 = arith.mulf %0, %27 : vector<16x128xf32>
    %29 = arith.addf %25, %28 : vector<16x128xf32>
    %c5 = arith.constant 5 : index
    %30 = memref.load %arg2[%c5] : memref<12xf32, #tpu.memory_space<smem>>
    %31 = vector.broadcast %30 : f32 to vector<16x128xf32>
    %32 = arith.mulf %6, %31 : vector<16x128xf32>
    %33 = arith.addf %29, %32 : vector<16x128xf32>
    %c1_5 = arith.constant 1 : index
    %34 = memref.load %arg3[%c1_5] : memref<4xf32, #tpu.memory_space<smem>>
    %35 = vector.broadcast %34 : f32 to vector<16x128xf32>
    %36 = arith.addf %33, %35 : vector<16x128xf32>
    %cst_6 = arith.constant 0.000000e+00 : f32
    %37 = vector.broadcast %cst_6 : f32 to vector<16x128xf32>
    %38 = arith.maximumf %36, %37 : vector<16x128xf32>
    %c6 = arith.constant 6 : index
    %39 = memref.load %arg2[%c6] : memref<12xf32, #tpu.memory_space<smem>>
    %40 = vector.broadcast %39 : f32 to vector<16x128xf32>
    %41 = arith.mulf %3, %40 : vector<16x128xf32>
    %c7 = arith.constant 7 : index
    %42 = memref.load %arg2[%c7] : memref<12xf32, #tpu.memory_space<smem>>
    %43 = vector.broadcast %42 : f32 to vector<16x128xf32>
    %44 = arith.mulf %0, %43 : vector<16x128xf32>
    %45 = arith.addf %41, %44 : vector<16x128xf32>
    %c8 = arith.constant 8 : index
    %46 = memref.load %arg2[%c8] : memref<12xf32, #tpu.memory_space<smem>>
    %47 = vector.broadcast %46 : f32 to vector<16x128xf32>
    %48 = arith.mulf %6, %47 : vector<16x128xf32>
    %49 = arith.addf %45, %48 : vector<16x128xf32>
    %c2_7 = arith.constant 2 : index
    %50 = memref.load %arg3[%c2_7] : memref<4xf32, #tpu.memory_space<smem>>
    %51 = vector.broadcast %50 : f32 to vector<16x128xf32>
    %52 = arith.addf %49, %51 : vector<16x128xf32>
    %cst_8 = arith.constant 0.000000e+00 : f32
    %53 = vector.broadcast %cst_8 : f32 to vector<16x128xf32>
    %54 = arith.maximumf %52, %53 : vector<16x128xf32>
    %c9 = arith.constant 9 : index
    %55 = memref.load %arg2[%c9] : memref<12xf32, #tpu.memory_space<smem>>
    %56 = vector.broadcast %55 : f32 to vector<16x128xf32>
    %57 = arith.mulf %3, %56 : vector<16x128xf32>
    %c10 = arith.constant 10 : index
    %58 = memref.load %arg2[%c10] : memref<12xf32, #tpu.memory_space<smem>>
    %59 = vector.broadcast %58 : f32 to vector<16x128xf32>
    %60 = arith.mulf %0, %59 : vector<16x128xf32>
    %61 = arith.addf %57, %60 : vector<16x128xf32>
    %c11 = arith.constant 11 : index
    %62 = memref.load %arg2[%c11] : memref<12xf32, #tpu.memory_space<smem>>
    %63 = vector.broadcast %62 : f32 to vector<16x128xf32>
    %64 = arith.mulf %6, %63 : vector<16x128xf32>
    %65 = arith.addf %61, %64 : vector<16x128xf32>
    %c3_9 = arith.constant 3 : index
    %66 = memref.load %arg3[%c3_9] : memref<4xf32, #tpu.memory_space<smem>>
    %67 = vector.broadcast %66 : f32 to vector<16x128xf32>
    %68 = arith.addf %65, %67 : vector<16x128xf32>
    %cst_10 = arith.constant 0.000000e+00 : f32
    %69 = vector.broadcast %cst_10 : f32 to vector<16x128xf32>
    %70 = arith.maximumf %68, %69 : vector<16x128xf32>
    %cst_11 = arith.constant 0.000000e+00 : f32
    %71 = vector.broadcast %cst_11 : f32 to vector<1x128xf32>
    %72 = vector.extract_strided_slice %22 {offsets = [0, 0], sizes = [15, 128], strides = [1, 1]} : vector<16x128xf32> to vector<15x128xf32>
    %73 = tpu.concatenate %71, %72 in 0 : vector<1x128xf32>, vector<15x128xf32> -> vector<16x128xf32>
    %cst_12 = arith.constant 0.000000e+00 : f32
    %74 = vector.broadcast %cst_12 : f32 to vector<1x128xf32>
    %75 = vector.extract_strided_slice %22 {offsets = [1, 0], sizes = [15, 128], strides = [1, 1]} : vector<16x128xf32> to vector<15x128xf32>
    %76 = tpu.concatenate %75, %74 in 0 : vector<15x128xf32>, vector<1x128xf32> -> vector<16x128xf32>
    %c0_13 = arith.constant 0 : index
    %77 = memref.load %arg4[%c0_13] : memref<48xf32, #tpu.memory_space<smem>>
    %78 = vector.broadcast %77 : f32 to vector<16x128xf32>
    %79 = arith.mulf %73, %78 : vector<16x128xf32>
    %c1_14 = arith.constant 1 : index
    %80 = memref.load %arg4[%c1_14] : memref<48xf32, #tpu.memory_space<smem>>
    %81 = vector.broadcast %80 : f32 to vector<16x128xf32>
    %82 = arith.mulf %22, %81 : vector<16x128xf32>
    %83 = arith.addf %79, %82 : vector<16x128xf32>
    %c2_15 = arith.constant 2 : index
    %84 = memref.load %arg4[%c2_15] : memref<48xf32, #tpu.memory_space<smem>>
    %85 = vector.broadcast %84 : f32 to vector<16x128xf32>
    %86 = arith.mulf %76, %85 : vector<16x128xf32>
    %87 = arith.addf %83, %86 : vector<16x128xf32>
    %c12 = arith.constant 12 : index
    %88 = memref.load %arg4[%c12] : memref<48xf32, #tpu.memory_space<smem>>
    %89 = vector.broadcast %88 : f32 to vector<16x128xf32>
    %90 = arith.mulf %73, %89 : vector<16x128xf32>
    %c13 = arith.constant 13 : index
    %91 = memref.load %arg4[%c13] : memref<48xf32, #tpu.memory_space<smem>>
    %92 = vector.broadcast %91 : f32 to vector<16x128xf32>
    %93 = arith.mulf %22, %92 : vector<16x128xf32>
    %94 = arith.addf %90, %93 : vector<16x128xf32>
    %c14 = arith.constant 14 : index
    %95 = memref.load %arg4[%c14] : memref<48xf32, #tpu.memory_space<smem>>
    %96 = vector.broadcast %95 : f32 to vector<16x128xf32>
    %97 = arith.mulf %76, %96 : vector<16x128xf32>
    %98 = arith.addf %94, %97 : vector<16x128xf32>
    %c24 = arith.constant 24 : index
    %99 = memref.load %arg4[%c24] : memref<48xf32, #tpu.memory_space<smem>>
    %100 = vector.broadcast %99 : f32 to vector<16x128xf32>
    %101 = arith.mulf %73, %100 : vector<16x128xf32>
    %c25 = arith.constant 25 : index
    %102 = memref.load %arg4[%c25] : memref<48xf32, #tpu.memory_space<smem>>
    %103 = vector.broadcast %102 : f32 to vector<16x128xf32>
    %104 = arith.mulf %22, %103 : vector<16x128xf32>
    %105 = arith.addf %101, %104 : vector<16x128xf32>
    %c26 = arith.constant 26 : index
    %106 = memref.load %arg4[%c26] : memref<48xf32, #tpu.memory_space<smem>>
    %107 = vector.broadcast %106 : f32 to vector<16x128xf32>
    %108 = arith.mulf %76, %107 : vector<16x128xf32>
    %109 = arith.addf %105, %108 : vector<16x128xf32>
    %c36 = arith.constant 36 : index
    %110 = memref.load %arg4[%c36] : memref<48xf32, #tpu.memory_space<smem>>
    %111 = vector.broadcast %110 : f32 to vector<16x128xf32>
    %112 = arith.mulf %73, %111 : vector<16x128xf32>
    %c37 = arith.constant 37 : index
    %113 = memref.load %arg4[%c37] : memref<48xf32, #tpu.memory_space<smem>>
    %114 = vector.broadcast %113 : f32 to vector<16x128xf32>
    %115 = arith.mulf %22, %114 : vector<16x128xf32>
    %116 = arith.addf %112, %115 : vector<16x128xf32>
    %c38 = arith.constant 38 : index
    %117 = memref.load %arg4[%c38] : memref<48xf32, #tpu.memory_space<smem>>
    %118 = vector.broadcast %117 : f32 to vector<16x128xf32>
    %119 = arith.mulf %76, %118 : vector<16x128xf32>
    %120 = arith.addf %116, %119 : vector<16x128xf32>
    %cst_16 = arith.constant 0.000000e+00 : f32
    %121 = vector.broadcast %cst_16 : f32 to vector<1x128xf32>
    %122 = vector.extract_strided_slice %38 {offsets = [0, 0], sizes = [15, 128], strides = [1, 1]} : vector<16x128xf32> to vector<15x128xf32>
    %123 = tpu.concatenate %121, %122 in 0 : vector<1x128xf32>, vector<15x128xf32> -> vector<16x128xf32>
    %cst_17 = arith.constant 0.000000e+00 : f32
    %124 = vector.broadcast %cst_17 : f32 to vector<1x128xf32>
    %125 = vector.extract_strided_slice %38 {offsets = [1, 0], sizes = [15, 128], strides = [1, 1]} : vector<16x128xf32> to vector<15x128xf32>
    %126 = tpu.concatenate %125, %124 in 0 : vector<15x128xf32>, vector<1x128xf32> -> vector<16x128xf32>
    %c3_18 = arith.constant 3 : index
    %127 = memref.load %arg4[%c3_18] : memref<48xf32, #tpu.memory_space<smem>>
    %128 = vector.broadcast %127 : f32 to vector<16x128xf32>
    %129 = arith.mulf %123, %128 : vector<16x128xf32>
    %130 = arith.addf %87, %129 : vector<16x128xf32>
    %c4_19 = arith.constant 4 : index
    %131 = memref.load %arg4[%c4_19] : memref<48xf32, #tpu.memory_space<smem>>
    %132 = vector.broadcast %131 : f32 to vector<16x128xf32>
    %133 = arith.mulf %38, %132 : vector<16x128xf32>
    %134 = arith.addf %130, %133 : vector<16x128xf32>
    %c5_20 = arith.constant 5 : index
    %135 = memref.load %arg4[%c5_20] : memref<48xf32, #tpu.memory_space<smem>>
    %136 = vector.broadcast %135 : f32 to vector<16x128xf32>
    %137 = arith.mulf %126, %136 : vector<16x128xf32>
    %138 = arith.addf %134, %137 : vector<16x128xf32>
    %c15 = arith.constant 15 : index
    %139 = memref.load %arg4[%c15] : memref<48xf32, #tpu.memory_space<smem>>
    %140 = vector.broadcast %139 : f32 to vector<16x128xf32>
    %141 = arith.mulf %123, %140 : vector<16x128xf32>
    %142 = arith.addf %98, %141 : vector<16x128xf32>
    %c16 = arith.constant 16 : index
    %143 = memref.load %arg4[%c16] : memref<48xf32, #tpu.memory_space<smem>>
    %144 = vector.broadcast %143 : f32 to vector<16x128xf32>
    %145 = arith.mulf %38, %144 : vector<16x128xf32>
    %146 = arith.addf %142, %145 : vector<16x128xf32>
    %c17 = arith.constant 17 : index
    %147 = memref.load %arg4[%c17] : memref<48xf32, #tpu.memory_space<smem>>
    %148 = vector.broadcast %147 : f32 to vector<16x128xf32>
    %149 = arith.mulf %126, %148 : vector<16x128xf32>
    %150 = arith.addf %146, %149 : vector<16x128xf32>
    %c27 = arith.constant 27 : index
    %151 = memref.load %arg4[%c27] : memref<48xf32, #tpu.memory_space<smem>>
    %152 = vector.broadcast %151 : f32 to vector<16x128xf32>
    %153 = arith.mulf %123, %152 : vector<16x128xf32>
    %154 = arith.addf %109, %153 : vector<16x128xf32>
    %c28 = arith.constant 28 : index
    %155 = memref.load %arg4[%c28] : memref<48xf32, #tpu.memory_space<smem>>
    %156 = vector.broadcast %155 : f32 to vector<16x128xf32>
    %157 = arith.mulf %38, %156 : vector<16x128xf32>
    %158 = arith.addf %154, %157 : vector<16x128xf32>
    %c29 = arith.constant 29 : index
    %159 = memref.load %arg4[%c29] : memref<48xf32, #tpu.memory_space<smem>>
    %160 = vector.broadcast %159 : f32 to vector<16x128xf32>
    %161 = arith.mulf %126, %160 : vector<16x128xf32>
    %162 = arith.addf %158, %161 : vector<16x128xf32>
    %c39 = arith.constant 39 : index
    %163 = memref.load %arg4[%c39] : memref<48xf32, #tpu.memory_space<smem>>
    %164 = vector.broadcast %163 : f32 to vector<16x128xf32>
    %165 = arith.mulf %123, %164 : vector<16x128xf32>
    %166 = arith.addf %120, %165 : vector<16x128xf32>
    %c40 = arith.constant 40 : index
    %167 = memref.load %arg4[%c40] : memref<48xf32, #tpu.memory_space<smem>>
    %168 = vector.broadcast %167 : f32 to vector<16x128xf32>
    %169 = arith.mulf %38, %168 : vector<16x128xf32>
    %170 = arith.addf %166, %169 : vector<16x128xf32>
    %c41 = arith.constant 41 : index
    %171 = memref.load %arg4[%c41] : memref<48xf32, #tpu.memory_space<smem>>
    %172 = vector.broadcast %171 : f32 to vector<16x128xf32>
    %173 = arith.mulf %126, %172 : vector<16x128xf32>
    %174 = arith.addf %170, %173 : vector<16x128xf32>
    %cst_21 = arith.constant 0.000000e+00 : f32
    %175 = vector.broadcast %cst_21 : f32 to vector<1x128xf32>
    %176 = vector.extract_strided_slice %54 {offsets = [0, 0], sizes = [15, 128], strides = [1, 1]} : vector<16x128xf32> to vector<15x128xf32>
    %177 = tpu.concatenate %175, %176 in 0 : vector<1x128xf32>, vector<15x128xf32> -> vector<16x128xf32>
    %cst_22 = arith.constant 0.000000e+00 : f32
    %178 = vector.broadcast %cst_22 : f32 to vector<1x128xf32>
    %179 = vector.extract_strided_slice %54 {offsets = [1, 0], sizes = [15, 128], strides = [1, 1]} : vector<16x128xf32> to vector<15x128xf32>
    %180 = tpu.concatenate %179, %178 in 0 : vector<15x128xf32>, vector<1x128xf32> -> vector<16x128xf32>
    %c6_23 = arith.constant 6 : index
    %181 = memref.load %arg4[%c6_23] : memref<48xf32, #tpu.memory_space<smem>>
    %182 = vector.broadcast %181 : f32 to vector<16x128xf32>
    %183 = arith.mulf %177, %182 : vector<16x128xf32>
    %184 = arith.addf %138, %183 : vector<16x128xf32>
    %c7_24 = arith.constant 7 : index
    %185 = memref.load %arg4[%c7_24] : memref<48xf32, #tpu.memory_space<smem>>
    %186 = vector.broadcast %185 : f32 to vector<16x128xf32>
    %187 = arith.mulf %54, %186 : vector<16x128xf32>
    %188 = arith.addf %184, %187 : vector<16x128xf32>
    %c8_25 = arith.constant 8 : index
    %189 = memref.load %arg4[%c8_25] : memref<48xf32, #tpu.memory_space<smem>>
    %190 = vector.broadcast %189 : f32 to vector<16x128xf32>
    %191 = arith.mulf %180, %190 : vector<16x128xf32>
    %192 = arith.addf %188, %191 : vector<16x128xf32>
    %c18 = arith.constant 18 : index
    %193 = memref.load %arg4[%c18] : memref<48xf32, #tpu.memory_space<smem>>
    %194 = vector.broadcast %193 : f32 to vector<16x128xf32>
    %195 = arith.mulf %177, %194 : vector<16x128xf32>
    %196 = arith.addf %150, %195 : vector<16x128xf32>
    %c19 = arith.constant 19 : index
    %197 = memref.load %arg4[%c19] : memref<48xf32, #tpu.memory_space<smem>>
    %198 = vector.broadcast %197 : f32 to vector<16x128xf32>
    %199 = arith.mulf %54, %198 : vector<16x128xf32>
    %200 = arith.addf %196, %199 : vector<16x128xf32>
    %c20 = arith.constant 20 : index
    %201 = memref.load %arg4[%c20] : memref<48xf32, #tpu.memory_space<smem>>
    %202 = vector.broadcast %201 : f32 to vector<16x128xf32>
    %203 = arith.mulf %180, %202 : vector<16x128xf32>
    %204 = arith.addf %200, %203 : vector<16x128xf32>
    %c30 = arith.constant 30 : index
    %205 = memref.load %arg4[%c30] : memref<48xf32, #tpu.memory_space<smem>>
    %206 = vector.broadcast %205 : f32 to vector<16x128xf32>
    %207 = arith.mulf %177, %206 : vector<16x128xf32>
    %208 = arith.addf %162, %207 : vector<16x128xf32>
    %c31 = arith.constant 31 : index
    %209 = memref.load %arg4[%c31] : memref<48xf32, #tpu.memory_space<smem>>
    %210 = vector.broadcast %209 : f32 to vector<16x128xf32>
    %211 = arith.mulf %54, %210 : vector<16x128xf32>
    %212 = arith.addf %208, %211 : vector<16x128xf32>
    %c32 = arith.constant 32 : index
    %213 = memref.load %arg4[%c32] : memref<48xf32, #tpu.memory_space<smem>>
    %214 = vector.broadcast %213 : f32 to vector<16x128xf32>
    %215 = arith.mulf %180, %214 : vector<16x128xf32>
    %216 = arith.addf %212, %215 : vector<16x128xf32>
    %c42 = arith.constant 42 : index
    %217 = memref.load %arg4[%c42] : memref<48xf32, #tpu.memory_space<smem>>
    %218 = vector.broadcast %217 : f32 to vector<16x128xf32>
    %219 = arith.mulf %177, %218 : vector<16x128xf32>
    %220 = arith.addf %174, %219 : vector<16x128xf32>
    %c43 = arith.constant 43 : index
    %221 = memref.load %arg4[%c43] : memref<48xf32, #tpu.memory_space<smem>>
    %222 = vector.broadcast %221 : f32 to vector<16x128xf32>
    %223 = arith.mulf %54, %222 : vector<16x128xf32>
    %224 = arith.addf %220, %223 : vector<16x128xf32>
    %c44 = arith.constant 44 : index
    %225 = memref.load %arg4[%c44] : memref<48xf32, #tpu.memory_space<smem>>
    %226 = vector.broadcast %225 : f32 to vector<16x128xf32>
    %227 = arith.mulf %180, %226 : vector<16x128xf32>
    %228 = arith.addf %224, %227 : vector<16x128xf32>
    %cst_26 = arith.constant 0.000000e+00 : f32
    %229 = vector.broadcast %cst_26 : f32 to vector<1x128xf32>
    %230 = vector.extract_strided_slice %70 {offsets = [0, 0], sizes = [15, 128], strides = [1, 1]} : vector<16x128xf32> to vector<15x128xf32>
    %231 = tpu.concatenate %229, %230 in 0 : vector<1x128xf32>, vector<15x128xf32> -> vector<16x128xf32>
    %cst_27 = arith.constant 0.000000e+00 : f32
    %232 = vector.broadcast %cst_27 : f32 to vector<1x128xf32>
    %233 = vector.extract_strided_slice %70 {offsets = [1, 0], sizes = [15, 128], strides = [1, 1]} : vector<16x128xf32> to vector<15x128xf32>
    %234 = tpu.concatenate %233, %232 in 0 : vector<15x128xf32>, vector<1x128xf32> -> vector<16x128xf32>
    %c9_28 = arith.constant 9 : index
    %235 = memref.load %arg4[%c9_28] : memref<48xf32, #tpu.memory_space<smem>>
    %236 = vector.broadcast %235 : f32 to vector<16x128xf32>
    %237 = arith.mulf %231, %236 : vector<16x128xf32>
    %238 = arith.addf %192, %237 : vector<16x128xf32>
    %c10_29 = arith.constant 10 : index
    %239 = memref.load %arg4[%c10_29] : memref<48xf32, #tpu.memory_space<smem>>
    %240 = vector.broadcast %239 : f32 to vector<16x128xf32>
    %241 = arith.mulf %70, %240 : vector<16x128xf32>
    %242 = arith.addf %238, %241 : vector<16x128xf32>
    %c11_30 = arith.constant 11 : index
    %243 = memref.load %arg4[%c11_30] : memref<48xf32, #tpu.memory_space<smem>>
    %244 = vector.broadcast %243 : f32 to vector<16x128xf32>
    %245 = arith.mulf %234, %244 : vector<16x128xf32>
    %246 = arith.addf %242, %245 : vector<16x128xf32>
    %c21 = arith.constant 21 : index
    %247 = memref.load %arg4[%c21] : memref<48xf32, #tpu.memory_space<smem>>
    %248 = vector.broadcast %247 : f32 to vector<16x128xf32>
    %249 = arith.mulf %231, %248 : vector<16x128xf32>
    %250 = arith.addf %204, %249 : vector<16x128xf32>
    %c22 = arith.constant 22 : index
    %251 = memref.load %arg4[%c22] : memref<48xf32, #tpu.memory_space<smem>>
    %252 = vector.broadcast %251 : f32 to vector<16x128xf32>
    %253 = arith.mulf %70, %252 : vector<16x128xf32>
    %254 = arith.addf %250, %253 : vector<16x128xf32>
    %c23 = arith.constant 23 : index
    %255 = memref.load %arg4[%c23] : memref<48xf32, #tpu.memory_space<smem>>
    %256 = vector.broadcast %255 : f32 to vector<16x128xf32>
    %257 = arith.mulf %234, %256 : vector<16x128xf32>
    %258 = arith.addf %254, %257 : vector<16x128xf32>
    %c33 = arith.constant 33 : index
    %259 = memref.load %arg4[%c33] : memref<48xf32, #tpu.memory_space<smem>>
    %260 = vector.broadcast %259 : f32 to vector<16x128xf32>
    %261 = arith.mulf %231, %260 : vector<16x128xf32>
    %262 = arith.addf %216, %261 : vector<16x128xf32>
    %c34 = arith.constant 34 : index
    %263 = memref.load %arg4[%c34] : memref<48xf32, #tpu.memory_space<smem>>
    %264 = vector.broadcast %263 : f32 to vector<16x128xf32>
    %265 = arith.mulf %70, %264 : vector<16x128xf32>
    %266 = arith.addf %262, %265 : vector<16x128xf32>
    %c35 = arith.constant 35 : index
    %267 = memref.load %arg4[%c35] : memref<48xf32, #tpu.memory_space<smem>>
    %268 = vector.broadcast %267 : f32 to vector<16x128xf32>
    %269 = arith.mulf %234, %268 : vector<16x128xf32>
    %270 = arith.addf %266, %269 : vector<16x128xf32>
    %c45 = arith.constant 45 : index
    %271 = memref.load %arg4[%c45] : memref<48xf32, #tpu.memory_space<smem>>
    %272 = vector.broadcast %271 : f32 to vector<16x128xf32>
    %273 = arith.mulf %231, %272 : vector<16x128xf32>
    %274 = arith.addf %228, %273 : vector<16x128xf32>
    %c46 = arith.constant 46 : index
    %275 = memref.load %arg4[%c46] : memref<48xf32, #tpu.memory_space<smem>>
    %276 = vector.broadcast %275 : f32 to vector<16x128xf32>
    %277 = arith.mulf %70, %276 : vector<16x128xf32>
    %278 = arith.addf %274, %277 : vector<16x128xf32>
    %c47 = arith.constant 47 : index
    %279 = memref.load %arg4[%c47] : memref<48xf32, #tpu.memory_space<smem>>
    %280 = vector.broadcast %279 : f32 to vector<16x128xf32>
    %281 = arith.mulf %234, %280 : vector<16x128xf32>
    %282 = arith.addf %278, %281 : vector<16x128xf32>
    %c0_31 = arith.constant 0 : index
    %283 = memref.load %arg5[%c0_31] : memref<4xf32, #tpu.memory_space<smem>>
    %284 = vector.broadcast %283 : f32 to vector<16x128xf32>
    %285 = arith.addf %246, %284 : vector<16x128xf32>
    %286 = arith.addf %285, %22 : vector<16x128xf32>
    %cst_32 = arith.constant 0.000000e+00 : f32
    %287 = vector.broadcast %cst_32 : f32 to vector<16x128xf32>
    %288 = arith.maximumf %286, %287 : vector<16x128xf32>
    %c1_33 = arith.constant 1 : index
    %289 = memref.load %arg5[%c1_33] : memref<4xf32, #tpu.memory_space<smem>>
    %290 = vector.broadcast %289 : f32 to vector<16x128xf32>
    %291 = arith.addf %258, %290 : vector<16x128xf32>
    %292 = arith.addf %291, %38 : vector<16x128xf32>
    %cst_34 = arith.constant 0.000000e+00 : f32
    %293 = vector.broadcast %cst_34 : f32 to vector<16x128xf32>
    %294 = arith.maximumf %292, %293 : vector<16x128xf32>
    %c2_35 = arith.constant 2 : index
    %295 = memref.load %arg5[%c2_35] : memref<4xf32, #tpu.memory_space<smem>>
    %296 = vector.broadcast %295 : f32 to vector<16x128xf32>
    %297 = arith.addf %270, %296 : vector<16x128xf32>
    %298 = arith.addf %297, %54 : vector<16x128xf32>
    %cst_36 = arith.constant 0.000000e+00 : f32
    %299 = vector.broadcast %cst_36 : f32 to vector<16x128xf32>
    %300 = arith.maximumf %298, %299 : vector<16x128xf32>
    %c3_37 = arith.constant 3 : index
    %301 = memref.load %arg5[%c3_37] : memref<4xf32, #tpu.memory_space<smem>>
    %302 = vector.broadcast %301 : f32 to vector<16x128xf32>
    %303 = arith.addf %282, %302 : vector<16x128xf32>
    %304 = arith.addf %303, %70 : vector<16x128xf32>
    %cst_38 = arith.constant 0.000000e+00 : f32
    %305 = vector.broadcast %cst_38 : f32 to vector<16x128xf32>
    %306 = arith.maximumf %304, %305 : vector<16x128xf32>
    %cst_39 = arith.constant 0.000000e+00 : f32
    %307 = vector.broadcast %cst_39 : f32 to vector<1x128xf32>
    %308 = vector.extract_strided_slice %288 {offsets = [0, 0], sizes = [15, 128], strides = [1, 1]} : vector<16x128xf32> to vector<15x128xf32>
    %309 = tpu.concatenate %307, %308 in 0 : vector<1x128xf32>, vector<15x128xf32> -> vector<16x128xf32>
    %cst_40 = arith.constant 0.000000e+00 : f32
    %310 = vector.broadcast %cst_40 : f32 to vector<1x128xf32>
    %311 = vector.extract_strided_slice %288 {offsets = [1, 0], sizes = [15, 128], strides = [1, 1]} : vector<16x128xf32> to vector<15x128xf32>
    %312 = tpu.concatenate %311, %310 in 0 : vector<15x128xf32>, vector<1x128xf32> -> vector<16x128xf32>
    %c0_41 = arith.constant 0 : index
    %313 = memref.load %arg6[%c0_41] : memref<48xf32, #tpu.memory_space<smem>>
    %314 = vector.broadcast %313 : f32 to vector<16x128xf32>
    %315 = arith.mulf %309, %314 : vector<16x128xf32>
    %c1_42 = arith.constant 1 : index
    %316 = memref.load %arg6[%c1_42] : memref<48xf32, #tpu.memory_space<smem>>
    %317 = vector.broadcast %316 : f32 to vector<16x128xf32>
    %318 = arith.mulf %288, %317 : vector<16x128xf32>
    %319 = arith.addf %315, %318 : vector<16x128xf32>
    %c2_43 = arith.constant 2 : index
    %320 = memref.load %arg6[%c2_43] : memref<48xf32, #tpu.memory_space<smem>>
    %321 = vector.broadcast %320 : f32 to vector<16x128xf32>
    %322 = arith.mulf %312, %321 : vector<16x128xf32>
    %323 = arith.addf %319, %322 : vector<16x128xf32>
    %c12_44 = arith.constant 12 : index
    %324 = memref.load %arg6[%c12_44] : memref<48xf32, #tpu.memory_space<smem>>
    %325 = vector.broadcast %324 : f32 to vector<16x128xf32>
    %326 = arith.mulf %309, %325 : vector<16x128xf32>
    %c13_45 = arith.constant 13 : index
    %327 = memref.load %arg6[%c13_45] : memref<48xf32, #tpu.memory_space<smem>>
    %328 = vector.broadcast %327 : f32 to vector<16x128xf32>
    %329 = arith.mulf %288, %328 : vector<16x128xf32>
    %330 = arith.addf %326, %329 : vector<16x128xf32>
    %c14_46 = arith.constant 14 : index
    %331 = memref.load %arg6[%c14_46] : memref<48xf32, #tpu.memory_space<smem>>
    %332 = vector.broadcast %331 : f32 to vector<16x128xf32>
    %333 = arith.mulf %312, %332 : vector<16x128xf32>
    %334 = arith.addf %330, %333 : vector<16x128xf32>
    %c24_47 = arith.constant 24 : index
    %335 = memref.load %arg6[%c24_47] : memref<48xf32, #tpu.memory_space<smem>>
    %336 = vector.broadcast %335 : f32 to vector<16x128xf32>
    %337 = arith.mulf %309, %336 : vector<16x128xf32>
    %c25_48 = arith.constant 25 : index
    %338 = memref.load %arg6[%c25_48] : memref<48xf32, #tpu.memory_space<smem>>
    %339 = vector.broadcast %338 : f32 to vector<16x128xf32>
    %340 = arith.mulf %288, %339 : vector<16x128xf32>
    %341 = arith.addf %337, %340 : vector<16x128xf32>
    %c26_49 = arith.constant 26 : index
    %342 = memref.load %arg6[%c26_49] : memref<48xf32, #tpu.memory_space<smem>>
    %343 = vector.broadcast %342 : f32 to vector<16x128xf32>
    %344 = arith.mulf %312, %343 : vector<16x128xf32>
    %345 = arith.addf %341, %344 : vector<16x128xf32>
    %c36_50 = arith.constant 36 : index
    %346 = memref.load %arg6[%c36_50] : memref<48xf32, #tpu.memory_space<smem>>
    %347 = vector.broadcast %346 : f32 to vector<16x128xf32>
    %348 = arith.mulf %309, %347 : vector<16x128xf32>
    %c37_51 = arith.constant 37 : index
    %349 = memref.load %arg6[%c37_51] : memref<48xf32, #tpu.memory_space<smem>>
    %350 = vector.broadcast %349 : f32 to vector<16x128xf32>
    %351 = arith.mulf %288, %350 : vector<16x128xf32>
    %352 = arith.addf %348, %351 : vector<16x128xf32>
    %c38_52 = arith.constant 38 : index
    %353 = memref.load %arg6[%c38_52] : memref<48xf32, #tpu.memory_space<smem>>
    %354 = vector.broadcast %353 : f32 to vector<16x128xf32>
    %355 = arith.mulf %312, %354 : vector<16x128xf32>
    %356 = arith.addf %352, %355 : vector<16x128xf32>
    %cst_53 = arith.constant 0.000000e+00 : f32
    %357 = vector.broadcast %cst_53 : f32 to vector<1x128xf32>
    %358 = vector.extract_strided_slice %294 {offsets = [0, 0], sizes = [15, 128], strides = [1, 1]} : vector<16x128xf32> to vector<15x128xf32>
    %359 = tpu.concatenate %357, %358 in 0 : vector<1x128xf32>, vector<15x128xf32> -> vector<16x128xf32>
    %cst_54 = arith.constant 0.000000e+00 : f32
    %360 = vector.broadcast %cst_54 : f32 to vector<1x128xf32>
    %361 = vector.extract_strided_slice %294 {offsets = [1, 0], sizes = [15, 128], strides = [1, 1]} : vector<16x128xf32> to vector<15x128xf32>
    %362 = tpu.concatenate %361, %360 in 0 : vector<15x128xf32>, vector<1x128xf32> -> vector<16x128xf32>
    %c3_55 = arith.constant 3 : index
    %363 = memref.load %arg6[%c3_55] : memref<48xf32, #tpu.memory_space<smem>>
    %364 = vector.broadcast %363 : f32 to vector<16x128xf32>
    %365 = arith.mulf %359, %364 : vector<16x128xf32>
    %366 = arith.addf %323, %365 : vector<16x128xf32>
    %c4_56 = arith.constant 4 : index
    %367 = memref.load %arg6[%c4_56] : memref<48xf32, #tpu.memory_space<smem>>
    %368 = vector.broadcast %367 : f32 to vector<16x128xf32>
    %369 = arith.mulf %294, %368 : vector<16x128xf32>
    %370 = arith.addf %366, %369 : vector<16x128xf32>
    %c5_57 = arith.constant 5 : index
    %371 = memref.load %arg6[%c5_57] : memref<48xf32, #tpu.memory_space<smem>>
    %372 = vector.broadcast %371 : f32 to vector<16x128xf32>
    %373 = arith.mulf %362, %372 : vector<16x128xf32>
    %374 = arith.addf %370, %373 : vector<16x128xf32>
    %c15_58 = arith.constant 15 : index
    %375 = memref.load %arg6[%c15_58] : memref<48xf32, #tpu.memory_space<smem>>
    %376 = vector.broadcast %375 : f32 to vector<16x128xf32>
    %377 = arith.mulf %359, %376 : vector<16x128xf32>
    %378 = arith.addf %334, %377 : vector<16x128xf32>
    %c16_59 = arith.constant 16 : index
    %379 = memref.load %arg6[%c16_59] : memref<48xf32, #tpu.memory_space<smem>>
    %380 = vector.broadcast %379 : f32 to vector<16x128xf32>
    %381 = arith.mulf %294, %380 : vector<16x128xf32>
    %382 = arith.addf %378, %381 : vector<16x128xf32>
    %c17_60 = arith.constant 17 : index
    %383 = memref.load %arg6[%c17_60] : memref<48xf32, #tpu.memory_space<smem>>
    %384 = vector.broadcast %383 : f32 to vector<16x128xf32>
    %385 = arith.mulf %362, %384 : vector<16x128xf32>
    %386 = arith.addf %382, %385 : vector<16x128xf32>
    %c27_61 = arith.constant 27 : index
    %387 = memref.load %arg6[%c27_61] : memref<48xf32, #tpu.memory_space<smem>>
    %388 = vector.broadcast %387 : f32 to vector<16x128xf32>
    %389 = arith.mulf %359, %388 : vector<16x128xf32>
    %390 = arith.addf %345, %389 : vector<16x128xf32>
    %c28_62 = arith.constant 28 : index
    %391 = memref.load %arg6[%c28_62] : memref<48xf32, #tpu.memory_space<smem>>
    %392 = vector.broadcast %391 : f32 to vector<16x128xf32>
    %393 = arith.mulf %294, %392 : vector<16x128xf32>
    %394 = arith.addf %390, %393 : vector<16x128xf32>
    %c29_63 = arith.constant 29 : index
    %395 = memref.load %arg6[%c29_63] : memref<48xf32, #tpu.memory_space<smem>>
    %396 = vector.broadcast %395 : f32 to vector<16x128xf32>
    %397 = arith.mulf %362, %396 : vector<16x128xf32>
    %398 = arith.addf %394, %397 : vector<16x128xf32>
    %c39_64 = arith.constant 39 : index
    %399 = memref.load %arg6[%c39_64] : memref<48xf32, #tpu.memory_space<smem>>
    %400 = vector.broadcast %399 : f32 to vector<16x128xf32>
    %401 = arith.mulf %359, %400 : vector<16x128xf32>
    %402 = arith.addf %356, %401 : vector<16x128xf32>
    %c40_65 = arith.constant 40 : index
    %403 = memref.load %arg6[%c40_65] : memref<48xf32, #tpu.memory_space<smem>>
    %404 = vector.broadcast %403 : f32 to vector<16x128xf32>
    %405 = arith.mulf %294, %404 : vector<16x128xf32>
    %406 = arith.addf %402, %405 : vector<16x128xf32>
    %c41_66 = arith.constant 41 : index
    %407 = memref.load %arg6[%c41_66] : memref<48xf32, #tpu.memory_space<smem>>
    %408 = vector.broadcast %407 : f32 to vector<16x128xf32>
    %409 = arith.mulf %362, %408 : vector<16x128xf32>
    %410 = arith.addf %406, %409 : vector<16x128xf32>
    %cst_67 = arith.constant 0.000000e+00 : f32
    %411 = vector.broadcast %cst_67 : f32 to vector<1x128xf32>
    %412 = vector.extract_strided_slice %300 {offsets = [0, 0], sizes = [15, 128], strides = [1, 1]} : vector<16x128xf32> to vector<15x128xf32>
    %413 = tpu.concatenate %411, %412 in 0 : vector<1x128xf32>, vector<15x128xf32> -> vector<16x128xf32>
    %cst_68 = arith.constant 0.000000e+00 : f32
    %414 = vector.broadcast %cst_68 : f32 to vector<1x128xf32>
    %415 = vector.extract_strided_slice %300 {offsets = [1, 0], sizes = [15, 128], strides = [1, 1]} : vector<16x128xf32> to vector<15x128xf32>
    %416 = tpu.concatenate %415, %414 in 0 : vector<15x128xf32>, vector<1x128xf32> -> vector<16x128xf32>
    %c6_69 = arith.constant 6 : index
    %417 = memref.load %arg6[%c6_69] : memref<48xf32, #tpu.memory_space<smem>>
    %418 = vector.broadcast %417 : f32 to vector<16x128xf32>
    %419 = arith.mulf %413, %418 : vector<16x128xf32>
    %420 = arith.addf %374, %419 : vector<16x128xf32>
    %c7_70 = arith.constant 7 : index
    %421 = memref.load %arg6[%c7_70] : memref<48xf32, #tpu.memory_space<smem>>
    %422 = vector.broadcast %421 : f32 to vector<16x128xf32>
    %423 = arith.mulf %300, %422 : vector<16x128xf32>
    %424 = arith.addf %420, %423 : vector<16x128xf32>
    %c8_71 = arith.constant 8 : index
    %425 = memref.load %arg6[%c8_71] : memref<48xf32, #tpu.memory_space<smem>>
    %426 = vector.broadcast %425 : f32 to vector<16x128xf32>
    %427 = arith.mulf %416, %426 : vector<16x128xf32>
    %428 = arith.addf %424, %427 : vector<16x128xf32>
    %c18_72 = arith.constant 18 : index
    %429 = memref.load %arg6[%c18_72] : memref<48xf32, #tpu.memory_space<smem>>
    %430 = vector.broadcast %429 : f32 to vector<16x128xf32>
    %431 = arith.mulf %413, %430 : vector<16x128xf32>
    %432 = arith.addf %386, %431 : vector<16x128xf32>
    %c19_73 = arith.constant 19 : index
    %433 = memref.load %arg6[%c19_73] : memref<48xf32, #tpu.memory_space<smem>>
    %434 = vector.broadcast %433 : f32 to vector<16x128xf32>
    %435 = arith.mulf %300, %434 : vector<16x128xf32>
    %436 = arith.addf %432, %435 : vector<16x128xf32>
    %c20_74 = arith.constant 20 : index
    %437 = memref.load %arg6[%c20_74] : memref<48xf32, #tpu.memory_space<smem>>
    %438 = vector.broadcast %437 : f32 to vector<16x128xf32>
    %439 = arith.mulf %416, %438 : vector<16x128xf32>
    %440 = arith.addf %436, %439 : vector<16x128xf32>
    %c30_75 = arith.constant 30 : index
    %441 = memref.load %arg6[%c30_75] : memref<48xf32, #tpu.memory_space<smem>>
    %442 = vector.broadcast %441 : f32 to vector<16x128xf32>
    %443 = arith.mulf %413, %442 : vector<16x128xf32>
    %444 = arith.addf %398, %443 : vector<16x128xf32>
    %c31_76 = arith.constant 31 : index
    %445 = memref.load %arg6[%c31_76] : memref<48xf32, #tpu.memory_space<smem>>
    %446 = vector.broadcast %445 : f32 to vector<16x128xf32>
    %447 = arith.mulf %300, %446 : vector<16x128xf32>
    %448 = arith.addf %444, %447 : vector<16x128xf32>
    %c32_77 = arith.constant 32 : index
    %449 = memref.load %arg6[%c32_77] : memref<48xf32, #tpu.memory_space<smem>>
    %450 = vector.broadcast %449 : f32 to vector<16x128xf32>
    %451 = arith.mulf %416, %450 : vector<16x128xf32>
    %452 = arith.addf %448, %451 : vector<16x128xf32>
    %c42_78 = arith.constant 42 : index
    %453 = memref.load %arg6[%c42_78] : memref<48xf32, #tpu.memory_space<smem>>
    %454 = vector.broadcast %453 : f32 to vector<16x128xf32>
    %455 = arith.mulf %413, %454 : vector<16x128xf32>
    %456 = arith.addf %410, %455 : vector<16x128xf32>
    %c43_79 = arith.constant 43 : index
    %457 = memref.load %arg6[%c43_79] : memref<48xf32, #tpu.memory_space<smem>>
    %458 = vector.broadcast %457 : f32 to vector<16x128xf32>
    %459 = arith.mulf %300, %458 : vector<16x128xf32>
    %460 = arith.addf %456, %459 : vector<16x128xf32>
    %c44_80 = arith.constant 44 : index
    %461 = memref.load %arg6[%c44_80] : memref<48xf32, #tpu.memory_space<smem>>
    %462 = vector.broadcast %461 : f32 to vector<16x128xf32>
    %463 = arith.mulf %416, %462 : vector<16x128xf32>
    %464 = arith.addf %460, %463 : vector<16x128xf32>
    %cst_81 = arith.constant 0.000000e+00 : f32
    %465 = vector.broadcast %cst_81 : f32 to vector<1x128xf32>
    %466 = vector.extract_strided_slice %306 {offsets = [0, 0], sizes = [15, 128], strides = [1, 1]} : vector<16x128xf32> to vector<15x128xf32>
    %467 = tpu.concatenate %465, %466 in 0 : vector<1x128xf32>, vector<15x128xf32> -> vector<16x128xf32>
    %cst_82 = arith.constant 0.000000e+00 : f32
    %468 = vector.broadcast %cst_82 : f32 to vector<1x128xf32>
    %469 = vector.extract_strided_slice %306 {offsets = [1, 0], sizes = [15, 128], strides = [1, 1]} : vector<16x128xf32> to vector<15x128xf32>
    %470 = tpu.concatenate %469, %468 in 0 : vector<15x128xf32>, vector<1x128xf32> -> vector<16x128xf32>
    %c9_83 = arith.constant 9 : index
    %471 = memref.load %arg6[%c9_83] : memref<48xf32, #tpu.memory_space<smem>>
    %472 = vector.broadcast %471 : f32 to vector<16x128xf32>
    %473 = arith.mulf %467, %472 : vector<16x128xf32>
    %474 = arith.addf %428, %473 : vector<16x128xf32>
    %c10_84 = arith.constant 10 : index
    %475 = memref.load %arg6[%c10_84] : memref<48xf32, #tpu.memory_space<smem>>
    %476 = vector.broadcast %475 : f32 to vector<16x128xf32>
    %477 = arith.mulf %306, %476 : vector<16x128xf32>
    %478 = arith.addf %474, %477 : vector<16x128xf32>
    %c11_85 = arith.constant 11 : index
    %479 = memref.load %arg6[%c11_85] : memref<48xf32, #tpu.memory_space<smem>>
    %480 = vector.broadcast %479 : f32 to vector<16x128xf32>
    %481 = arith.mulf %470, %480 : vector<16x128xf32>
    %482 = arith.addf %478, %481 : vector<16x128xf32>
    %c21_86 = arith.constant 21 : index
    %483 = memref.load %arg6[%c21_86] : memref<48xf32, #tpu.memory_space<smem>>
    %484 = vector.broadcast %483 : f32 to vector<16x128xf32>
    %485 = arith.mulf %467, %484 : vector<16x128xf32>
    %486 = arith.addf %440, %485 : vector<16x128xf32>
    %c22_87 = arith.constant 22 : index
    %487 = memref.load %arg6[%c22_87] : memref<48xf32, #tpu.memory_space<smem>>
    %488 = vector.broadcast %487 : f32 to vector<16x128xf32>
    %489 = arith.mulf %306, %488 : vector<16x128xf32>
    %490 = arith.addf %486, %489 : vector<16x128xf32>
    %c23_88 = arith.constant 23 : index
    %491 = memref.load %arg6[%c23_88] : memref<48xf32, #tpu.memory_space<smem>>
    %492 = vector.broadcast %491 : f32 to vector<16x128xf32>
    %493 = arith.mulf %470, %492 : vector<16x128xf32>
    %494 = arith.addf %490, %493 : vector<16x128xf32>
    %c33_89 = arith.constant 33 : index
    %495 = memref.load %arg6[%c33_89] : memref<48xf32, #tpu.memory_space<smem>>
    %496 = vector.broadcast %495 : f32 to vector<16x128xf32>
    %497 = arith.mulf %467, %496 : vector<16x128xf32>
    %498 = arith.addf %452, %497 : vector<16x128xf32>
    %c34_90 = arith.constant 34 : index
    %499 = memref.load %arg6[%c34_90] : memref<48xf32, #tpu.memory_space<smem>>
    %500 = vector.broadcast %499 : f32 to vector<16x128xf32>
    %501 = arith.mulf %306, %500 : vector<16x128xf32>
    %502 = arith.addf %498, %501 : vector<16x128xf32>
    %c35_91 = arith.constant 35 : index
    %503 = memref.load %arg6[%c35_91] : memref<48xf32, #tpu.memory_space<smem>>
    %504 = vector.broadcast %503 : f32 to vector<16x128xf32>
    %505 = arith.mulf %470, %504 : vector<16x128xf32>
    %506 = arith.addf %502, %505 : vector<16x128xf32>
    %c45_92 = arith.constant 45 : index
    %507 = memref.load %arg6[%c45_92] : memref<48xf32, #tpu.memory_space<smem>>
    %508 = vector.broadcast %507 : f32 to vector<16x128xf32>
    %509 = arith.mulf %467, %508 : vector<16x128xf32>
    %510 = arith.addf %464, %509 : vector<16x128xf32>
    %c46_93 = arith.constant 46 : index
    %511 = memref.load %arg6[%c46_93] : memref<48xf32, #tpu.memory_space<smem>>
    %512 = vector.broadcast %511 : f32 to vector<16x128xf32>
    %513 = arith.mulf %306, %512 : vector<16x128xf32>
    %514 = arith.addf %510, %513 : vector<16x128xf32>
    %c47_94 = arith.constant 47 : index
    %515 = memref.load %arg6[%c47_94] : memref<48xf32, #tpu.memory_space<smem>>
    %516 = vector.broadcast %515 : f32 to vector<16x128xf32>
    %517 = arith.mulf %470, %516 : vector<16x128xf32>
    %518 = arith.addf %514, %517 : vector<16x128xf32>
    %c0_95 = arith.constant 0 : index
    %519 = memref.load %arg7[%c0_95] : memref<4xf32, #tpu.memory_space<smem>>
    %520 = vector.broadcast %519 : f32 to vector<16x128xf32>
    %521 = arith.addf %482, %520 : vector<16x128xf32>
    %522 = arith.addf %521, %288 : vector<16x128xf32>
    %cst_96 = arith.constant 0.000000e+00 : f32
    %523 = vector.broadcast %cst_96 : f32 to vector<16x128xf32>
    %524 = arith.maximumf %522, %523 : vector<16x128xf32>
    %c1_97 = arith.constant 1 : index
    %525 = memref.load %arg7[%c1_97] : memref<4xf32, #tpu.memory_space<smem>>
    %526 = vector.broadcast %525 : f32 to vector<16x128xf32>
    %527 = arith.addf %494, %526 : vector<16x128xf32>
    %528 = arith.addf %527, %294 : vector<16x128xf32>
    %cst_98 = arith.constant 0.000000e+00 : f32
    %529 = vector.broadcast %cst_98 : f32 to vector<16x128xf32>
    %530 = arith.maximumf %528, %529 : vector<16x128xf32>
    %c2_99 = arith.constant 2 : index
    %531 = memref.load %arg7[%c2_99] : memref<4xf32, #tpu.memory_space<smem>>
    %532 = vector.broadcast %531 : f32 to vector<16x128xf32>
    %533 = arith.addf %506, %532 : vector<16x128xf32>
    %534 = arith.addf %533, %300 : vector<16x128xf32>
    %cst_100 = arith.constant 0.000000e+00 : f32
    %535 = vector.broadcast %cst_100 : f32 to vector<16x128xf32>
    %536 = arith.maximumf %534, %535 : vector<16x128xf32>
    %c3_101 = arith.constant 3 : index
    %537 = memref.load %arg7[%c3_101] : memref<4xf32, #tpu.memory_space<smem>>
    %538 = vector.broadcast %537 : f32 to vector<16x128xf32>
    %539 = arith.addf %518, %538 : vector<16x128xf32>
    %540 = arith.addf %539, %306 : vector<16x128xf32>
    %cst_102 = arith.constant 0.000000e+00 : f32
    %541 = vector.broadcast %cst_102 : f32 to vector<16x128xf32>
    %542 = arith.maximumf %540, %541 : vector<16x128xf32>
    %cst_103 = arith.constant 0.000000e+00 : f32
    %543 = vector.broadcast %cst_103 : f32 to vector<1x128xf32>
    %544 = vector.extract_strided_slice %524 {offsets = [0, 0], sizes = [15, 128], strides = [1, 1]} : vector<16x128xf32> to vector<15x128xf32>
    %545 = tpu.concatenate %543, %544 in 0 : vector<1x128xf32>, vector<15x128xf32> -> vector<16x128xf32>
    %cst_104 = arith.constant 0.000000e+00 : f32
    %546 = vector.broadcast %cst_104 : f32 to vector<1x128xf32>
    %547 = vector.extract_strided_slice %524 {offsets = [1, 0], sizes = [15, 128], strides = [1, 1]} : vector<16x128xf32> to vector<15x128xf32>
    %548 = tpu.concatenate %547, %546 in 0 : vector<15x128xf32>, vector<1x128xf32> -> vector<16x128xf32>
    %c0_105 = arith.constant 0 : index
    %549 = memref.load %arg8[%c0_105] : memref<48xf32, #tpu.memory_space<smem>>
    %550 = vector.broadcast %549 : f32 to vector<16x128xf32>
    %551 = arith.mulf %545, %550 : vector<16x128xf32>
    %c1_106 = arith.constant 1 : index
    %552 = memref.load %arg8[%c1_106] : memref<48xf32, #tpu.memory_space<smem>>
    %553 = vector.broadcast %552 : f32 to vector<16x128xf32>
    %554 = arith.mulf %524, %553 : vector<16x128xf32>
    %555 = arith.addf %551, %554 : vector<16x128xf32>
    %c2_107 = arith.constant 2 : index
    %556 = memref.load %arg8[%c2_107] : memref<48xf32, #tpu.memory_space<smem>>
    %557 = vector.broadcast %556 : f32 to vector<16x128xf32>
    %558 = arith.mulf %548, %557 : vector<16x128xf32>
    %559 = arith.addf %555, %558 : vector<16x128xf32>
    %c12_108 = arith.constant 12 : index
    %560 = memref.load %arg8[%c12_108] : memref<48xf32, #tpu.memory_space<smem>>
    %561 = vector.broadcast %560 : f32 to vector<16x128xf32>
    %562 = arith.mulf %545, %561 : vector<16x128xf32>
    %c13_109 = arith.constant 13 : index
    %563 = memref.load %arg8[%c13_109] : memref<48xf32, #tpu.memory_space<smem>>
    %564 = vector.broadcast %563 : f32 to vector<16x128xf32>
    %565 = arith.mulf %524, %564 : vector<16x128xf32>
    %566 = arith.addf %562, %565 : vector<16x128xf32>
    %c14_110 = arith.constant 14 : index
    %567 = memref.load %arg8[%c14_110] : memref<48xf32, #tpu.memory_space<smem>>
    %568 = vector.broadcast %567 : f32 to vector<16x128xf32>
    %569 = arith.mulf %548, %568 : vector<16x128xf32>
    %570 = arith.addf %566, %569 : vector<16x128xf32>
    %c24_111 = arith.constant 24 : index
    %571 = memref.load %arg8[%c24_111] : memref<48xf32, #tpu.memory_space<smem>>
    %572 = vector.broadcast %571 : f32 to vector<16x128xf32>
    %573 = arith.mulf %545, %572 : vector<16x128xf32>
    %c25_112 = arith.constant 25 : index
    %574 = memref.load %arg8[%c25_112] : memref<48xf32, #tpu.memory_space<smem>>
    %575 = vector.broadcast %574 : f32 to vector<16x128xf32>
    %576 = arith.mulf %524, %575 : vector<16x128xf32>
    %577 = arith.addf %573, %576 : vector<16x128xf32>
    %c26_113 = arith.constant 26 : index
    %578 = memref.load %arg8[%c26_113] : memref<48xf32, #tpu.memory_space<smem>>
    %579 = vector.broadcast %578 : f32 to vector<16x128xf32>
    %580 = arith.mulf %548, %579 : vector<16x128xf32>
    %581 = arith.addf %577, %580 : vector<16x128xf32>
    %c36_114 = arith.constant 36 : index
    %582 = memref.load %arg8[%c36_114] : memref<48xf32, #tpu.memory_space<smem>>
    %583 = vector.broadcast %582 : f32 to vector<16x128xf32>
    %584 = arith.mulf %545, %583 : vector<16x128xf32>
    %c37_115 = arith.constant 37 : index
    %585 = memref.load %arg8[%c37_115] : memref<48xf32, #tpu.memory_space<smem>>
    %586 = vector.broadcast %585 : f32 to vector<16x128xf32>
    %587 = arith.mulf %524, %586 : vector<16x128xf32>
    %588 = arith.addf %584, %587 : vector<16x128xf32>
    %c38_116 = arith.constant 38 : index
    %589 = memref.load %arg8[%c38_116] : memref<48xf32, #tpu.memory_space<smem>>
    %590 = vector.broadcast %589 : f32 to vector<16x128xf32>
    %591 = arith.mulf %548, %590 : vector<16x128xf32>
    %592 = arith.addf %588, %591 : vector<16x128xf32>
    %cst_117 = arith.constant 0.000000e+00 : f32
    %593 = vector.broadcast %cst_117 : f32 to vector<1x128xf32>
    %594 = vector.extract_strided_slice %530 {offsets = [0, 0], sizes = [15, 128], strides = [1, 1]} : vector<16x128xf32> to vector<15x128xf32>
    %595 = tpu.concatenate %593, %594 in 0 : vector<1x128xf32>, vector<15x128xf32> -> vector<16x128xf32>
    %cst_118 = arith.constant 0.000000e+00 : f32
    %596 = vector.broadcast %cst_118 : f32 to vector<1x128xf32>
    %597 = vector.extract_strided_slice %530 {offsets = [1, 0], sizes = [15, 128], strides = [1, 1]} : vector<16x128xf32> to vector<15x128xf32>
    %598 = tpu.concatenate %597, %596 in 0 : vector<15x128xf32>, vector<1x128xf32> -> vector<16x128xf32>
    %c3_119 = arith.constant 3 : index
    %599 = memref.load %arg8[%c3_119] : memref<48xf32, #tpu.memory_space<smem>>
    %600 = vector.broadcast %599 : f32 to vector<16x128xf32>
    %601 = arith.mulf %595, %600 : vector<16x128xf32>
    %602 = arith.addf %559, %601 : vector<16x128xf32>
    %c4_120 = arith.constant 4 : index
    %603 = memref.load %arg8[%c4_120] : memref<48xf32, #tpu.memory_space<smem>>
    %604 = vector.broadcast %603 : f32 to vector<16x128xf32>
    %605 = arith.mulf %530, %604 : vector<16x128xf32>
    %606 = arith.addf %602, %605 : vector<16x128xf32>
    %c5_121 = arith.constant 5 : index
    %607 = memref.load %arg8[%c5_121] : memref<48xf32, #tpu.memory_space<smem>>
    %608 = vector.broadcast %607 : f32 to vector<16x128xf32>
    %609 = arith.mulf %598, %608 : vector<16x128xf32>
    %610 = arith.addf %606, %609 : vector<16x128xf32>
    %c15_122 = arith.constant 15 : index
    %611 = memref.load %arg8[%c15_122] : memref<48xf32, #tpu.memory_space<smem>>
    %612 = vector.broadcast %611 : f32 to vector<16x128xf32>
    %613 = arith.mulf %595, %612 : vector<16x128xf32>
    %614 = arith.addf %570, %613 : vector<16x128xf32>
    %c16_123 = arith.constant 16 : index
    %615 = memref.load %arg8[%c16_123] : memref<48xf32, #tpu.memory_space<smem>>
    %616 = vector.broadcast %615 : f32 to vector<16x128xf32>
    %617 = arith.mulf %530, %616 : vector<16x128xf32>
    %618 = arith.addf %614, %617 : vector<16x128xf32>
    %c17_124 = arith.constant 17 : index
    %619 = memref.load %arg8[%c17_124] : memref<48xf32, #tpu.memory_space<smem>>
    %620 = vector.broadcast %619 : f32 to vector<16x128xf32>
    %621 = arith.mulf %598, %620 : vector<16x128xf32>
    %622 = arith.addf %618, %621 : vector<16x128xf32>
    %c27_125 = arith.constant 27 : index
    %623 = memref.load %arg8[%c27_125] : memref<48xf32, #tpu.memory_space<smem>>
    %624 = vector.broadcast %623 : f32 to vector<16x128xf32>
    %625 = arith.mulf %595, %624 : vector<16x128xf32>
    %626 = arith.addf %581, %625 : vector<16x128xf32>
    %c28_126 = arith.constant 28 : index
    %627 = memref.load %arg8[%c28_126] : memref<48xf32, #tpu.memory_space<smem>>
    %628 = vector.broadcast %627 : f32 to vector<16x128xf32>
    %629 = arith.mulf %530, %628 : vector<16x128xf32>
    %630 = arith.addf %626, %629 : vector<16x128xf32>
    %c29_127 = arith.constant 29 : index
    %631 = memref.load %arg8[%c29_127] : memref<48xf32, #tpu.memory_space<smem>>
    %632 = vector.broadcast %631 : f32 to vector<16x128xf32>
    %633 = arith.mulf %598, %632 : vector<16x128xf32>
    %634 = arith.addf %630, %633 : vector<16x128xf32>
    %c39_128 = arith.constant 39 : index
    %635 = memref.load %arg8[%c39_128] : memref<48xf32, #tpu.memory_space<smem>>
    %636 = vector.broadcast %635 : f32 to vector<16x128xf32>
    %637 = arith.mulf %595, %636 : vector<16x128xf32>
    %638 = arith.addf %592, %637 : vector<16x128xf32>
    %c40_129 = arith.constant 40 : index
    %639 = memref.load %arg8[%c40_129] : memref<48xf32, #tpu.memory_space<smem>>
    %640 = vector.broadcast %639 : f32 to vector<16x128xf32>
    %641 = arith.mulf %530, %640 : vector<16x128xf32>
    %642 = arith.addf %638, %641 : vector<16x128xf32>
    %c41_130 = arith.constant 41 : index
    %643 = memref.load %arg8[%c41_130] : memref<48xf32, #tpu.memory_space<smem>>
    %644 = vector.broadcast %643 : f32 to vector<16x128xf32>
    %645 = arith.mulf %598, %644 : vector<16x128xf32>
    %646 = arith.addf %642, %645 : vector<16x128xf32>
    %cst_131 = arith.constant 0.000000e+00 : f32
    %647 = vector.broadcast %cst_131 : f32 to vector<1x128xf32>
    %648 = vector.extract_strided_slice %536 {offsets = [0, 0], sizes = [15, 128], strides = [1, 1]} : vector<16x128xf32> to vector<15x128xf32>
    %649 = tpu.concatenate %647, %648 in 0 : vector<1x128xf32>, vector<15x128xf32> -> vector<16x128xf32>
    %cst_132 = arith.constant 0.000000e+00 : f32
    %650 = vector.broadcast %cst_132 : f32 to vector<1x128xf32>
    %651 = vector.extract_strided_slice %536 {offsets = [1, 0], sizes = [15, 128], strides = [1, 1]} : vector<16x128xf32> to vector<15x128xf32>
    %652 = tpu.concatenate %651, %650 in 0 : vector<15x128xf32>, vector<1x128xf32> -> vector<16x128xf32>
    %c6_133 = arith.constant 6 : index
    %653 = memref.load %arg8[%c6_133] : memref<48xf32, #tpu.memory_space<smem>>
    %654 = vector.broadcast %653 : f32 to vector<16x128xf32>
    %655 = arith.mulf %649, %654 : vector<16x128xf32>
    %656 = arith.addf %610, %655 : vector<16x128xf32>
    %c7_134 = arith.constant 7 : index
    %657 = memref.load %arg8[%c7_134] : memref<48xf32, #tpu.memory_space<smem>>
    %658 = vector.broadcast %657 : f32 to vector<16x128xf32>
    %659 = arith.mulf %536, %658 : vector<16x128xf32>
    %660 = arith.addf %656, %659 : vector<16x128xf32>
    %c8_135 = arith.constant 8 : index
    %661 = memref.load %arg8[%c8_135] : memref<48xf32, #tpu.memory_space<smem>>
    %662 = vector.broadcast %661 : f32 to vector<16x128xf32>
    %663 = arith.mulf %652, %662 : vector<16x128xf32>
    %664 = arith.addf %660, %663 : vector<16x128xf32>
    %c18_136 = arith.constant 18 : index
    %665 = memref.load %arg8[%c18_136] : memref<48xf32, #tpu.memory_space<smem>>
    %666 = vector.broadcast %665 : f32 to vector<16x128xf32>
    %667 = arith.mulf %649, %666 : vector<16x128xf32>
    %668 = arith.addf %622, %667 : vector<16x128xf32>
    %c19_137 = arith.constant 19 : index
    %669 = memref.load %arg8[%c19_137] : memref<48xf32, #tpu.memory_space<smem>>
    %670 = vector.broadcast %669 : f32 to vector<16x128xf32>
    %671 = arith.mulf %536, %670 : vector<16x128xf32>
    %672 = arith.addf %668, %671 : vector<16x128xf32>
    %c20_138 = arith.constant 20 : index
    %673 = memref.load %arg8[%c20_138] : memref<48xf32, #tpu.memory_space<smem>>
    %674 = vector.broadcast %673 : f32 to vector<16x128xf32>
    %675 = arith.mulf %652, %674 : vector<16x128xf32>
    %676 = arith.addf %672, %675 : vector<16x128xf32>
    %c30_139 = arith.constant 30 : index
    %677 = memref.load %arg8[%c30_139] : memref<48xf32, #tpu.memory_space<smem>>
    %678 = vector.broadcast %677 : f32 to vector<16x128xf32>
    %679 = arith.mulf %649, %678 : vector<16x128xf32>
    %680 = arith.addf %634, %679 : vector<16x128xf32>
    %c31_140 = arith.constant 31 : index
    %681 = memref.load %arg8[%c31_140] : memref<48xf32, #tpu.memory_space<smem>>
    %682 = vector.broadcast %681 : f32 to vector<16x128xf32>
    %683 = arith.mulf %536, %682 : vector<16x128xf32>
    %684 = arith.addf %680, %683 : vector<16x128xf32>
    %c32_141 = arith.constant 32 : index
    %685 = memref.load %arg8[%c32_141] : memref<48xf32, #tpu.memory_space<smem>>
    %686 = vector.broadcast %685 : f32 to vector<16x128xf32>
    %687 = arith.mulf %652, %686 : vector<16x128xf32>
    %688 = arith.addf %684, %687 : vector<16x128xf32>
    %c42_142 = arith.constant 42 : index
    %689 = memref.load %arg8[%c42_142] : memref<48xf32, #tpu.memory_space<smem>>
    %690 = vector.broadcast %689 : f32 to vector<16x128xf32>
    %691 = arith.mulf %649, %690 : vector<16x128xf32>
    %692 = arith.addf %646, %691 : vector<16x128xf32>
    %c43_143 = arith.constant 43 : index
    %693 = memref.load %arg8[%c43_143] : memref<48xf32, #tpu.memory_space<smem>>
    %694 = vector.broadcast %693 : f32 to vector<16x128xf32>
    %695 = arith.mulf %536, %694 : vector<16x128xf32>
    %696 = arith.addf %692, %695 : vector<16x128xf32>
    %c44_144 = arith.constant 44 : index
    %697 = memref.load %arg8[%c44_144] : memref<48xf32, #tpu.memory_space<smem>>
    %698 = vector.broadcast %697 : f32 to vector<16x128xf32>
    %699 = arith.mulf %652, %698 : vector<16x128xf32>
    %700 = arith.addf %696, %699 : vector<16x128xf32>
    %cst_145 = arith.constant 0.000000e+00 : f32
    %701 = vector.broadcast %cst_145 : f32 to vector<1x128xf32>
    %702 = vector.extract_strided_slice %542 {offsets = [0, 0], sizes = [15, 128], strides = [1, 1]} : vector<16x128xf32> to vector<15x128xf32>
    %703 = tpu.concatenate %701, %702 in 0 : vector<1x128xf32>, vector<15x128xf32> -> vector<16x128xf32>
    %cst_146 = arith.constant 0.000000e+00 : f32
    %704 = vector.broadcast %cst_146 : f32 to vector<1x128xf32>
    %705 = vector.extract_strided_slice %542 {offsets = [1, 0], sizes = [15, 128], strides = [1, 1]} : vector<16x128xf32> to vector<15x128xf32>
    %706 = tpu.concatenate %705, %704 in 0 : vector<15x128xf32>, vector<1x128xf32> -> vector<16x128xf32>
    %c9_147 = arith.constant 9 : index
    %707 = memref.load %arg8[%c9_147] : memref<48xf32, #tpu.memory_space<smem>>
    %708 = vector.broadcast %707 : f32 to vector<16x128xf32>
    %709 = arith.mulf %703, %708 : vector<16x128xf32>
    %710 = arith.addf %664, %709 : vector<16x128xf32>
    %c10_148 = arith.constant 10 : index
    %711 = memref.load %arg8[%c10_148] : memref<48xf32, #tpu.memory_space<smem>>
    %712 = vector.broadcast %711 : f32 to vector<16x128xf32>
    %713 = arith.mulf %542, %712 : vector<16x128xf32>
    %714 = arith.addf %710, %713 : vector<16x128xf32>
    %c11_149 = arith.constant 11 : index
    %715 = memref.load %arg8[%c11_149] : memref<48xf32, #tpu.memory_space<smem>>
    %716 = vector.broadcast %715 : f32 to vector<16x128xf32>
    %717 = arith.mulf %706, %716 : vector<16x128xf32>
    %718 = arith.addf %714, %717 : vector<16x128xf32>
    %c21_150 = arith.constant 21 : index
    %719 = memref.load %arg8[%c21_150] : memref<48xf32, #tpu.memory_space<smem>>
    %720 = vector.broadcast %719 : f32 to vector<16x128xf32>
    %721 = arith.mulf %703, %720 : vector<16x128xf32>
    %722 = arith.addf %676, %721 : vector<16x128xf32>
    %c22_151 = arith.constant 22 : index
    %723 = memref.load %arg8[%c22_151] : memref<48xf32, #tpu.memory_space<smem>>
    %724 = vector.broadcast %723 : f32 to vector<16x128xf32>
    %725 = arith.mulf %542, %724 : vector<16x128xf32>
    %726 = arith.addf %722, %725 : vector<16x128xf32>
    %c23_152 = arith.constant 23 : index
    %727 = memref.load %arg8[%c23_152] : memref<48xf32, #tpu.memory_space<smem>>
    %728 = vector.broadcast %727 : f32 to vector<16x128xf32>
    %729 = arith.mulf %706, %728 : vector<16x128xf32>
    %730 = arith.addf %726, %729 : vector<16x128xf32>
    %c33_153 = arith.constant 33 : index
    %731 = memref.load %arg8[%c33_153] : memref<48xf32, #tpu.memory_space<smem>>
    %732 = vector.broadcast %731 : f32 to vector<16x128xf32>
    %733 = arith.mulf %703, %732 : vector<16x128xf32>
    %734 = arith.addf %688, %733 : vector<16x128xf32>
    %c34_154 = arith.constant 34 : index
    %735 = memref.load %arg8[%c34_154] : memref<48xf32, #tpu.memory_space<smem>>
    %736 = vector.broadcast %735 : f32 to vector<16x128xf32>
    %737 = arith.mulf %542, %736 : vector<16x128xf32>
    %738 = arith.addf %734, %737 : vector<16x128xf32>
    %c35_155 = arith.constant 35 : index
    %739 = memref.load %arg8[%c35_155] : memref<48xf32, #tpu.memory_space<smem>>
    %740 = vector.broadcast %739 : f32 to vector<16x128xf32>
    %741 = arith.mulf %706, %740 : vector<16x128xf32>
    %742 = arith.addf %738, %741 : vector<16x128xf32>
    %c45_156 = arith.constant 45 : index
    %743 = memref.load %arg8[%c45_156] : memref<48xf32, #tpu.memory_space<smem>>
    %744 = vector.broadcast %743 : f32 to vector<16x128xf32>
    %745 = arith.mulf %703, %744 : vector<16x128xf32>
    %746 = arith.addf %700, %745 : vector<16x128xf32>
    %c46_157 = arith.constant 46 : index
    %747 = memref.load %arg8[%c46_157] : memref<48xf32, #tpu.memory_space<smem>>
    %748 = vector.broadcast %747 : f32 to vector<16x128xf32>
    %749 = arith.mulf %542, %748 : vector<16x128xf32>
    %750 = arith.addf %746, %749 : vector<16x128xf32>
    %c47_158 = arith.constant 47 : index
    %751 = memref.load %arg8[%c47_158] : memref<48xf32, #tpu.memory_space<smem>>
    %752 = vector.broadcast %751 : f32 to vector<16x128xf32>
    %753 = arith.mulf %706, %752 : vector<16x128xf32>
    %754 = arith.addf %750, %753 : vector<16x128xf32>
    %c0_159 = arith.constant 0 : index
    %755 = memref.load %arg9[%c0_159] : memref<4xf32, #tpu.memory_space<smem>>
    %756 = vector.broadcast %755 : f32 to vector<16x128xf32>
    %757 = arith.addf %718, %756 : vector<16x128xf32>
    %758 = arith.addf %757, %524 : vector<16x128xf32>
    %cst_160 = arith.constant 0.000000e+00 : f32
    %759 = vector.broadcast %cst_160 : f32 to vector<16x128xf32>
    %760 = arith.maximumf %758, %759 : vector<16x128xf32>
    %c1_161 = arith.constant 1 : index
    %761 = memref.load %arg9[%c1_161] : memref<4xf32, #tpu.memory_space<smem>>
    %762 = vector.broadcast %761 : f32 to vector<16x128xf32>
    %763 = arith.addf %730, %762 : vector<16x128xf32>
    %764 = arith.addf %763, %530 : vector<16x128xf32>
    %cst_162 = arith.constant 0.000000e+00 : f32
    %765 = vector.broadcast %cst_162 : f32 to vector<16x128xf32>
    %766 = arith.maximumf %764, %765 : vector<16x128xf32>
    %c2_163 = arith.constant 2 : index
    %767 = memref.load %arg9[%c2_163] : memref<4xf32, #tpu.memory_space<smem>>
    %768 = vector.broadcast %767 : f32 to vector<16x128xf32>
    %769 = arith.addf %742, %768 : vector<16x128xf32>
    %770 = arith.addf %769, %536 : vector<16x128xf32>
    %cst_164 = arith.constant 0.000000e+00 : f32
    %771 = vector.broadcast %cst_164 : f32 to vector<16x128xf32>
    %772 = arith.maximumf %770, %771 : vector<16x128xf32>
    %c3_165 = arith.constant 3 : index
    %773 = memref.load %arg9[%c3_165] : memref<4xf32, #tpu.memory_space<smem>>
    %774 = vector.broadcast %773 : f32 to vector<16x128xf32>
    %775 = arith.addf %754, %774 : vector<16x128xf32>
    %776 = arith.addf %775, %542 : vector<16x128xf32>
    %cst_166 = arith.constant 0.000000e+00 : f32
    %777 = vector.broadcast %cst_166 : f32 to vector<16x128xf32>
    %778 = arith.maximumf %776, %777 : vector<16x128xf32>
    %779 = tpu.concatenate %760, %766, %772, %778 in 0 : vector<16x128xf32>, vector<16x128xf32>, vector<16x128xf32>, vector<16x128xf32> -> vector<64x128xf32>
    %c0_167 = arith.constant 0 : index
    %c0_168 = arith.constant 0 : index
    %780 = vector.load %arg10[%c0_167, %c0_168] : memref<32x64xf32, #tpu.memory_space<vmem>>, vector<32x64xf32>
    %cst_169 = arith.constant dense<0.000000e+00> : vector<32x128xf32>
    %781 = tpu.matmul %780, %779, %cst_169 {dimension_numbers = #tpu.dot_dimension_numbers<[1], [0], [0], [1], [0, 0, 1, 1], [], []>} : vector<32x64xf32>, vector<64x128xf32>, vector<32x128xf32> -> vector<32x128xf32>
    %c0_170 = arith.constant 0 : index
    %c0_171 = arith.constant 0 : index
    %782 = vector.load %arg11[%c0_170, %c0_171] : memref<32x1xf32, #tpu.memory_space<vmem>>, vector<32x1xf32>
    %783 = vector.broadcast %782 : vector<32x1xf32> to vector<32x128xf32>
    %784 = arith.addf %781, %783 : vector<32x128xf32>
    %c0_172 = arith.constant 0 : index
    %c0_173 = arith.constant 0 : index
    %785 = vector.load %arg12[%c0_172, %c0_173] : memref<32x128xf32, #tpu.memory_space<vmem>>, vector<32x128xf32>
    tpu.vector_store %arg12[%c0_172, %c0_173], %784 {strides = array<i32>} : memref<32x128xf32, #tpu.memory_space<vmem>>, vector<32x128xf32>,
    return
  }
  func.func @transform_0(%arg0: i32) -> (i32, i32) {
    %c0_i32 = arith.constant 0 : i32
    %c0_i32_0 = arith.constant 0 : i32
    return %c0_i32, %arg0 : i32, i32
  }
  func.func @transform_1(%arg0: i32) -> i32 {
    %c0_i32 = arith.constant 0 : i32
    %c0_i32_0 = arith.constant 0 : i32
    return %c0_i32 : i32
  }
  func.func @transform_2(%arg0: i32) -> i32 {
    %c0_i32 = arith.constant 0 : i32
    %c0_i32_0 = arith.constant 0 : i32
    return %c0_i32 : i32
  }
  func.func @transform_3(%arg0: i32) -> i32 {
    %c0_i32 = arith.constant 0 : i32
    %c0_i32_0 = arith.constant 0 : i32
    return %c0_i32 : i32
  }
  func.func @transform_4(%arg0: i32) -> i32 {
    %c0_i32 = arith.constant 0 : i32
    %c0_i32_0 = arith.constant 0 : i32
    return %c0_i32 : i32
  }
  func.func @transform_5(%arg0: i32) -> i32 {
    %c0_i32 = arith.constant 0 : i32
    %c0_i32_0 = arith.constant 0 : i32
    return %c0_i32 : i32
  }
  func.func @transform_6(%arg0: i32) -> i32 {
    %c0_i32 = arith.constant 0 : i32
    %c0_i32_0 = arith.constant 0 : i32
    return %c0_i32 : i32
  }
  func.func @transform_7(%arg0: i32) -> i32 {
    %c0_i32 = arith.constant 0 : i32
    %c0_i32_0 = arith.constant 0 : i32
    return %c0_i32 : i32
  }
  func.func @transform_8(%arg0: i32) -> i32 {
    %c0_i32 = arith.constant 0 : i32
    %c0_i32_0 = arith.constant 0 : i32
    return %c0_i32 : i32
  }
  func.func @transform_9(%arg0: i32) -> (i32, i32) {
    %c0_i32 = arith.constant 0 : i32
    %c0_i32_0 = arith.constant 0 : i32
    %c0_i32_1 = arith.constant 0 : i32
    return %c0_i32, %c0_i32_0 : i32, i32
  }
  func.func @transform_10(%arg0: i32) -> (i32, i32) {
    %c0_i32 = arith.constant 0 : i32
    %c0_i32_0 = arith.constant 0 : i32
    %c0_i32_1 = arith.constant 0 : i32
    return %c0_i32, %c0_i32_0 : i32, i32
  }
  func.func @transform_11(%arg0: i32) -> (i32, i32) {
    %c0_i32 = arith.constant 0 : i32
    %c0_i32_0 = arith.constant 0 : i32
    return %c0_i32, %arg0 : i32, i32
  }
}

</mosaic_0001>

<llo_original>
// kernel: tpu_custom_call.1
$region0: #{tpu_custom_call.1}
  #allocation0 [shape = 'u32[]', space=smem, size = 0x4, offset = 0x4, fixed_abs, tag = 'smem constant byte address 0x4 - core index']
  #allocation1 [shape = 'u32[144,128]{1,0:T(1,128)}', space=vmem, size = 0x12000, scoped, tag = 'internal scratch']
  %s0 = inlined_call_operand.vmem [shape: f32[16,128], index: 0, kind: input, shape index: {}]
  %s1 = inlined_call_operand.vmem [shape: f32[12], index: 1, kind: input, shape index: {}]
  %s2 = inlined_call_operand.vmem [shape: f32[4], index: 2, kind: input, shape index: {}]
  %s3 = inlined_call_operand.vmem [shape: f32[48], index: 3, kind: input, shape index: {}]
  %s4 = inlined_call_operand.vmem [shape: f32[4], index: 4, kind: input, shape index: {}]
  %s5 = inlined_call_operand.vmem [shape: f32[48], index: 5, kind: input, shape index: {}]
  %s6 = inlined_call_operand.vmem [shape: f32[4], index: 6, kind: input, shape index: {}]
  %s7 = inlined_call_operand.vmem [shape: f32[48], index: 7, kind: input, shape index: {}]
  %s8 = inlined_call_operand.vmem [shape: f32[4], index: 8, kind: input, shape index: {}]
  %s9 = inlined_call_operand.vmem [shape: f32[32,64], index: 9, kind: input, shape index: {}]
  %s10 = inlined_call_operand.vmem [shape: f32[32,1], index: 10, kind: input, shape index: {}]
  %s11 = inlined_call_operand.hbm [shape: f32[32,128], index: 11, kind: output, shape index: {}]
  %s12 = sld [smem:[#allocation0]]
  $region86: #{tpu_custom_call.1} parent=0
    _
  %s14 = ssub.s32 1, %s12
  %s15 = scalar_select 0, %s14, %s12
  $region1: #{tpu_custom_call.1} parent=0
    #allocation2 [shape = 'u8[512]{0}', space=smem, size = 0x200, scoped, tag = 'input window, operand 1, single buffered']
    #allocation3 [shape = 's32[1]{0}', space=sflag, size = 0x4, scoped, tag = 'scoped memory for tpu_custom_call.1']
    #allocation4 [shape = 's32[1]{0}', space=sflag, size = 0x4, scoped, tag = 'scoped memory for tpu_custom_call.1']
    #allocation5 [shape = 'u8[512]{0}', space=smem, size = 0x200, scoped, tag = 'input window, operand 2, single buffered']
    #allocation6 [shape = 's32[1]{0}', space=sflag, size = 0x4, scoped, tag = 'scoped memory for tpu_custom_call.1']
    #allocation7 [shape = 'u8[512]{0}', space=smem, size = 0x200, scoped, tag = 'input window, operand 3, single buffered']
    #allocation8 [shape = 'u8[512]{0}', space=smem, size = 0x200, scoped, tag = 'input window, operand 4, single buffered']
    #allocation9 [shape = 's32[1]{0}', space=sflag, size = 0x4, scoped, tag = 'scoped memory for tpu_custom_call.1']
    #allocation10 [shape = 'u8[512]{0}', space=smem, size = 0x200, scoped, tag = 'input window, operand 5, single buffered']
    #allocation11 [shape = 'u8[512]{0}', space=smem, size = 0x200, scoped, tag = 'input window, operand 6, single buffered']
    #allocation12 [shape = 's32[1]{0}', space=sflag, size = 0x4, scoped, tag = 'scoped memory for tpu_custom_call.1']
    #allocation13 [shape = 'u8[512]{0}', space=smem, size = 0x200, scoped, tag = 'input window, operand 7, single buffered']
    #allocation14 [shape = 'u8[512]{0}', space=smem, size = 0x200, scoped, tag = 'input window, operand 8, single buffered']
    #allocation15 [shape = 's32[1]{0}', space=sflag, size = 0x4, scoped, tag = 'scoped memory for tpu_custom_call.1']
    #allocation16 [shape = 'u8[16384]{0}', space=vmem, size = 0x4000, scoped, tag = 'output window, operand 0, single buffered']
    %16 = vsyncpa [#allocation4], 0
    %17 = vsyncpa [#allocation6], 0
    %18 = vsyncpa [#allocation9], 0
    %19 = vsyncpa [#allocation12], 0
    %20 = vsyncpa [#allocation15], 0
    %21 = vsyncpa [#allocation3], 0
    // Predicated region
    $region2: #{tpu_custom_call.1} parent=1 // pred_check
      _
    $region3: #{tpu_custom_call.1} parent=1 // pred_check_branch
      %23 = sbr.rel (0) target = $region5
    $region4: #{tpu_custom_call.1} parent=1 // pred_region
      _
    $region5: #{tpu_custom_call.1} parent=1 // pred_fallthru
      _
    // Predicated region
    $region6: #{tpu_custom_call.1} parent=1 // pred_check
      _
    $region7: #{tpu_custom_call.1} parent=1 // pred_check_branch
      %25 = sbr.rel (0) target = $region9
    $region8: #{tpu_custom_call.1} parent=1 // pred_region
      %s27 = ssub.s32 16, 16
      %28 = vsyncadd [#allocation4], %s27
      %s30 = sshll.u32 %s1, 4
      %s31 = int_to_ptr.vmem [resolvable:$true] %s30
      %33 = dma.vmem_to_smem %s31, 16, [#allocation2], [#allocation4]
    $region9: #{tpu_custom_call.1} parent=1 // pred_fallthru
      _
    // Predicated region
    $region10: #{tpu_custom_call.1} parent=1 // pred_check
      _
    $region11: #{tpu_custom_call.1} parent=1 // pred_check_branch
      %35 = sbr.rel (0) target = $region13
    $region12: #{tpu_custom_call.1} parent=1 // pred_region
      %s37 = ssub.s32 16, 16
      %38 = vsyncadd [#allocation6], %s37
      %s40 = sshll.u32 %s2, 4
      %s41 = int_to_ptr.vmem [resolvable:$true] %s40
      %43 = dma.vmem_to_smem %s41, 16, [#allocation5], [#allocation6]
    $region13: #{tpu_custom_call.1} parent=1 // pred_fallthru
      _
    // Predicated region
    $region14: #{tpu_custom_call.1} parent=1 // pred_check
      _
    $region15: #{tpu_custom_call.1} parent=1 // pred_check_branch
      %45 = sbr.rel (0) target = $region17
    $region16: #{tpu_custom_call.1} parent=1 // pred_region
      %s47 = ssub.s32 16, 16
      %48 = vsyncadd [#allocation6], %s47
      %s50 = sshll.u32 %s3, 4
      %s51 = int_to_ptr.vmem [resolvable:$true] %s50
      %53 = dma.vmem_to_smem %s51, 16, [#allocation7], [#allocation6]
    $region17: #{tpu_custom_call.1} parent=1 // pred_fallthru
      _
    // Predicated region
    $region18: #{tpu_custom_call.1} parent=1 // pred_check
      _
    $region19: #{tpu_custom_call.1} parent=1 // pred_check_branch
      %55 = sbr.rel (0) target = $region21
    $region20: #{tpu_custom_call.1} parent=1 // pred_region
      %s57 = ssub.s32 16, 16
      %58 = vsyncadd [#allocation9], %s57
      %s60 = sshll.u32 %s4, 4
      %s61 = int_to_ptr.vmem [resolvable:$true] %s60
      %63 = dma.vmem_to_smem %s61, 16, [#allocation8], [#allocation9]
    $region21: #{tpu_custom_call.1} parent=1 // pred_fallthru
      _
    // Predicated region
    $region22: #{tpu_custom_call.1} parent=1 // pred_check
      _
    $region23: #{tpu_custom_call.1} parent=1 // pred_check_branch
      %65 = sbr.rel (0) target = $region25
    $region24: #{tpu_custom_call.1} parent=1 // pred_region
      %s67 = ssub.s32 16, 16
      %68 = vsyncadd [#allocation9], %s67
      %s70 = sshll.u32 %s5, 4
      %s71 = int_to_ptr.vmem [resolvable:$true] %s70
      %73 = dma.vmem_to_smem %s71, 16, [#allocation10], [#allocation9]
    $region25: #{tpu_custom_call.1} parent=1 // pred_fallthru
      _
    // Predicated region
    $region26: #{tpu_custom_call.1} parent=1 // pred_check
      _
    $region27: #{tpu_custom_call.1} parent=1 // pred_check_branch
      %75 = sbr.rel (0) target = $region29
    $region28: #{tpu_custom_call.1} parent=1 // pred_region
      %s77 = ssub.s32 16, 16
      %78 = vsyncadd [#allocation12], %s77
      %s80 = sshll.u32 %s6, 4
      %s81 = int_to_ptr.vmem [resolvable:$true] %s80
      %83 = dma.vmem_to_smem %s81, 16, [#allocation11], [#allocation12]
    $region29: #{tpu_custom_call.1} parent=1 // pred_fallthru
      _
    // Predicated region
    $region30: #{tpu_custom_call.1} parent=1 // pred_check
      _
    $region31: #{tpu_custom_call.1} parent=1 // pred_check_branch
      %85 = sbr.rel (0) target = $region33
    $region32: #{tpu_custom_call.1} parent=1 // pred_region
      %s87 = ssub.s32 16, 16
      %88 = vsyncadd [#allocation12], %s87
      %s90 = sshll.u32 %s7, 4
      %s91 = int_to_ptr.vmem [resolvable:$true] %s90
      %93 = dma.vmem_to_smem %s91, 16, [#allocation13], [#allocation12]
    $region33: #{tpu_custom_call.1} parent=1 // pred_fallthru
      _
    // Predicated region
    $region34: #{tpu_custom_call.1} parent=1 // pred_check
      _
    $region35: #{tpu_custom_call.1} parent=1 // pred_check_branch
      %95 = sbr.rel (0) target = $region37
    $region36: #{tpu_custom_call.1} parent=1 // pred_region
      %s97 = ssub.s32 16, 16
      %98 = vsyncadd [#allocation15], %s97
      %s100 = sshll.u32 %s8, 4
      %s101 = int_to_ptr.vmem [resolvable:$true] %s100
      %103 = dma.vmem_to_smem %s101, 16, [#allocation14], [#allocation15]
    $region37: #{tpu_custom_call.1} parent=1 // pred_fallthru
      _
    // Predicated region
    $region38: #{tpu_custom_call.1} parent=1 // pred_check
      _
    $region39: #{tpu_custom_call.1} parent=1 // pred_check_branch
      %105 = sbr.rel (0) target = $region41
    $region40: #{tpu_custom_call.1} parent=1 // pred_region
      _
    $region41: #{tpu_custom_call.1} parent=1 // pred_fallthru
      _
    // Predicated region
    $region42: #{tpu_custom_call.1} parent=1 // pred_check
      _
    $region43: #{tpu_custom_call.1} parent=1 // pred_check_branch
      %107 = sbr.rel (0) target = $region45
    $region44: #{tpu_custom_call.1} parent=1 // pred_region
      _
    $region45: #{tpu_custom_call.1} parent=1 // pred_fallthru
      _
    // Predicated region
    $region46: #{tpu_custom_call.1} parent=1 // pred_check
      _
    $region47: #{tpu_custom_call.1} parent=1 // pred_check_branch
      %109 = sbr.rel (0) target = $region49
    $region48: #{tpu_custom_call.1} parent=1 // pred_region
      %110 = dma.done [#allocation4], 16
    $region49: #{tpu_custom_call.1} parent=1 // pred_fallthru
      _
    // Predicated region
    $region50: #{tpu_custom_call.1} parent=1 // pred_check
      _
    $region51: #{tpu_custom_call.1} parent=1 // pred_check_branch
      %112 = sbr.rel (0) target = $region53
    $region52: #{tpu_custom_call.1} parent=1 // pred_region
      %113 = dma.done [#allocation6], 16
    $region53: #{tpu_custom_call.1} parent=1 // pred_fallthru
      _
    // Predicated region
    $region54: #{tpu_custom_call.1} parent=1 // pred_check
      _
    $region55: #{tpu_custom_call.1} parent=1 // pred_check_branch
      %115 = sbr.rel (0) target = $region57
    $region56: #{tpu_custom_call.1} parent=1 // pred_region
      %116 = dma.done [#allocation6], 16
    $region57: #{tpu_custom_call.1} parent=1 // pred_fallthru
      _
    // Predicated region
    $region58: #{tpu_custom_call.1} parent=1 // pred_check
      _
    $region59: #{tpu_custom_call.1} parent=1 // pred_check_branch
      %118 = sbr.rel (0) target = $region61
    $region60: #{tpu_custom_call.1} parent=1 // pred_region
      %119 = dma.done [#allocation9], 16
    $region61: #{tpu_custom_call.1} parent=1 // pred_fallthru
      _
    // Predicated region
    $region62: #{tpu_custom_call.1} parent=1 // pred_check
      _
    $region63: #{tpu_custom_call.1} parent=1 // pred_check_branch
      %121 = sbr.rel (0) target = $region65
    $region64: #{tpu_custom_call.1} parent=1 // pred_region
      %122 = dma.done [#allocation9], 16
    $region65: #{tpu_custom_call.1} parent=1 // pred_fallthru
      _
    // Predicated region
    $region66: #{tpu_custom_call.1} parent=1 // pred_check
      _
    $region67: #{tpu_custom_call.1} parent=1 // pred_check_branch
      %124 = sbr.rel (0) target = $region69
    $region68: #{tpu_custom_call.1} parent=1 // pred_region
      %125 = dma.done [#allocation12], 16
    $region69: #{tpu_custom_call.1} parent=1 // pred_fallthru
      _
    // Predicated region
    $region70: #{tpu_custom_call.1} parent=1 // pred_check
      _
    $region71: #{tpu_custom_call.1} parent=1 // pred_check_branch
      %127 = sbr.rel (0) target = $region73
    $region72: #{tpu_custom_call.1} parent=1 // pred_region
      %128 = dma.done [#allocation12], 16
    $region73: #{tpu_custom_call.1} parent=1 // pred_fallthru
      _
    // Predicated region
    $region74: #{tpu_custom_call.1} parent=1 // pred_check
      _
    $region75: #{tpu_custom_call.1} parent=1 // pred_check_branch
      %130 = sbr.rel (0) target = $region77
    $region76: #{tpu_custom_call.1} parent=1 // pred_region
      %131 = dma.done [#allocation15], 16
    $region77: #{tpu_custom_call.1} parent=1 // pred_fallthru
      _
    %132 = sfence
    %v133 = vld [vmem:[%s0] sm:$0xff]
    %v134 = vld [vmem:[%s0 + $0x8] sm:$0xff]
    %vm137 = vcmask 1040384
    %v138 = vrot.slane %v133, 7
    %v139 = vrot.slane %v134, 7
    %v140 = vsel %vm137, %v138, %v139
    %v143 = vsel %vm137, 0.0, %v138
    %vm144 = vcmask 1046528
    %v145 = vrot.slane %v133, 1
    %v146 = vrot.slane %v134, 1
    %v147 = vsel %vm144, %v145, %v146
    %v150 = vsel %vm144, %v146, 0.0
    %s151 = sld [smem:[#allocation2]]
    %v152 = vstv %s151
    %v153 = vmul.f32 %v143, %v152
    %v154 = vmul.f32 %v140, %v152
    %s155 = sld [smem:[#allocation2 + $0x1]]
    %v156 = vstv %s155
    %v157 = vmul.f32 %v133, %v156
    %v158 = vmul.f32 %v134, %v156
    %v159 = vadd.f32 %v153, %v157
    %v160 = vadd.f32 %v154, %v158
    %s161 = sld [smem:[#allocation2 + $0x2]]
    %v162 = vstv %s161
    %v163 = vmul.f32 %v147, %v162
    %v164 = vmul.f32 %v150, %v162
    %v165 = vadd.f32 %v159, %v163
    %v166 = vadd.f32 %v160, %v164
    %s167 = sld [smem:[#allocation5]]
    %v168 = vstv %s167
    %v169 = vadd.f32 %v165, %v168
    %v170 = vadd.f32 %v166, %v168
    %v171 = vmax.f32 %v169, 0.0
    %v172 = vmax.f32 %v170, 0.0
    %s173 = sld [smem:[#allocation2 + $0x3]]
    %v174 = vstv %s173
    %v175 = vmul.f32 %v143, %v174
    %v176 = vmul.f32 %v140, %v174
    %s177 = sld [smem:[#allocation2 + $0x4]]
    %v178 = vstv %s177
    %v179 = vmul.f32 %v133, %v178
    %v180 = vmul.f32 %v134, %v178
    %v181 = vadd.f32 %v175, %v179
    %v182 = vadd.f32 %v176, %v180
    %s183 = sld [smem:[#allocation2 + $0x5]]
    %v184 = vstv %s183
    %v185 = vmul.f32 %v147, %v184
    %v186 = vmul.f32 %v150, %v184
    %v187 = vadd.f32 %v181, %v185
    %v188 = vadd.f32 %v182, %v186
    %s189 = sld [smem:[#allocation5 + $0x1]]
    %v190 = vstv %s189
    %v191 = vadd.f32 %v187, %v190
    %v192 = vadd.f32 %v188, %v190
    %v193 = vmax.f32 %v191, 0.0
    %v194 = vmax.f32 %v192, 0.0
    %s195 = sld [smem:[#allocation2 + $0x6]]
    %v196 = vstv %s195
    %v197 = vmul.f32 %v143, %v196
    %v198 = vmul.f32 %v140, %v196
    %s199 = sld [smem:[#allocation2 + $0x7]]
    %v200 = vstv %s199
    %v201 = vmul.f32 %v133, %v200
    %v202 = vmul.f32 %v134, %v200
    %v203 = vadd.f32 %v197, %v201
    %v204 = vadd.f32 %v198, %v202
    %s205 = sld [smem:[#allocation2 + $0x8]]
    %v206 = vstv %s205
    %v207 = vmul.f32 %v147, %v206
    %v208 = vmul.f32 %v150, %v206
    %v209 = vadd.f32 %v203, %v207
    %v210 = vadd.f32 %v204, %v208
    %s211 = sld [smem:[#allocation5 + $0x2]]
    %v212 = vstv %s211
    %v213 = vadd.f32 %v209, %v212
    %v214 = vadd.f32 %v210, %v212
    %v215 = vmax.f32 %v213, 0.0
    %v216 = vmax.f32 %v214, 0.0
    %s217 = sld [smem:[#allocation2 + $0x9]]
    %v218 = vstv %s217
    %v219 = vmul.f32 %v143, %v218
    %v220 = vmul.f32 %v140, %v218
    %s221 = sld [smem:[#allocation2 + $0xa]]
    %v222 = vstv %s221
    %v223 = vmul.f32 %v133, %v222
    %v224 = vmul.f32 %v134, %v222
    %v225 = vadd.f32 %v219, %v223
    %v226 = vadd.f32 %v220, %v224
    %s227 = sld [smem:[#allocation2 + $0xb]]
    %v228 = vstv %s227
    %v229 = vmul.f32 %v147, %v228
    %v230 = vmul.f32 %v150, %v228
    %v231 = vadd.f32 %v225, %v229
    %v232 = vadd.f32 %v226, %v230
    %s233 = sld [smem:[#allocation5 + $0x3]]
    %v234 = vstv %s233
    %v235 = vadd.f32 %v231, %v234
    %v236 = vadd.f32 %v232, %v234
    %v237 = vmax.f32 %v235, 0.0
    %v238 = vmax.f32 %v236, 0.0
    %v241 = vrot.slane %v171, 7
    %v242 = vrot.slane %v172, 7
    %v243 = vsel %vm137, %v241, %v242
    %v246 = vsel %vm137, 0.0, %v241
    %v247 = vrot.slane %v171, 1
    %v248 = vrot.slane %v172, 1
    %v249 = vsel %vm144, %v247, %v248
    %v252 = vsel %vm144, %v248, 0.0
    %s253 = sld [smem:[#allocation7]]
    %v254 = vstv %s253
    %v255 = vmul.f32 %v246, %v254
    %v256 = vmul.f32 %v243, %v254
    %s257 = sld [smem:[#allocation7 + $0x1]]
    %v258 = vstv %s257
    %v259 = vmul.f32 %v171, %v258
    %v260 = vmul.f32 %v172, %v258
    %v261 = vadd.f32 %v255, %v259
    %v262 = vadd.f32 %v256, %v260
    %s263 = sld [smem:[#allocation7 + $0x2]]
    %v264 = vstv %s263
    %v265 = vmul.f32 %v249, %v264
    %v266 = vmul.f32 %v252, %v264
    %v267 = vadd.f32 %v261, %v265
    %v268 = vadd.f32 %v262, %v266
    %s269 = sld [smem:[#allocation7 + $0xc]]
    %v270 = vstv %s269
    %v271 = vmul.f32 %v246, %v270
    %v272 = vmul.f32 %v243, %v270
    %s273 = sld [smem:[#allocation7 + $0xd]]
    %v274 = vstv %s273
    %v275 = vmul.f32 %v171, %v274
    %v276 = vmul.f32 %v172, %v274
    %v277 = vadd.f32 %v271, %v275
    %v278 = vadd.f32 %v272, %v276
    %s279 = sld [smem:[#allocation7 + $0xe]]
    %v280 = vstv %s279
    %v281 = vmul.f32 %v249, %v280
    %v282 = vmul.f32 %v252, %v280
    %v283 = vadd.f32 %v277, %v281
    %v284 = vadd.f32 %v278, %v282
    %s285 = sld [smem:[#allocation7 + $0x18]]
    %v286 = vstv %s285
    %v287 = vmul.f32 %v246, %v286
    %v288 = vmul.f32 %v243, %v286
    %s289 = sld [smem:[#allocation7 + $0x19]]
    %v290 = vstv %s289
    %v291 = vmul.f32 %v171, %v290
    %v292 = vmul.f32 %v172, %v290
    %v293 = vadd.f32 %v287, %v291
    %v294 = vadd.f32 %v288, %v292
    %s295 = sld [smem:[#allocation7 + $0x1a]]
    %v296 = vstv %s295
    %v297 = vmul.f32 %v249, %v296
    %v298 = vmul.f32 %v252, %v296
    %v299 = vadd.f32 %v293, %v297
    %v300 = vadd.f32 %v294, %v298
    %s301 = sld [smem:[#allocation7 + $0x24]]
    %v302 = vstv %s301
    %v303 = vmul.f32 %v246, %v302
    %v304 = vmul.f32 %v243, %v302
    %s305 = sld [smem:[#allocation7 + $0x25]]
    %v306 = vstv %s305
    %v307 = vmul.f32 %v171, %v306
    %v308 = vmul.f32 %v172, %v306
    %v309 = vadd.f32 %v303, %v307
    %v310 = vadd.f32 %v304, %v308
    %s311 = sld [smem:[#allocation7 + $0x26]]
    %v312 = vstv %s311
    %v313 = vmul.f32 %v249, %v312
    %v314 = vmul.f32 %v252, %v312
    %v315 = vadd.f32 %v309, %v313
    %v316 = vadd.f32 %v310, %v314
    %v319 = vrot.slane %v193, 7
    %v320 = vrot.slane %v194, 7
    %v321 = vsel %vm137, %v319, %v320
    %v324 = vsel %vm137, 0.0, %v319
    %v325 = vrot.slane %v193, 1
    %v326 = vrot.slane %v194, 1
    %v327 = vsel %vm144, %v325, %v326
    %v330 = vsel %vm144, %v326, 0.0
    %s331 = sld [smem:[#allocation7 + $0x3]]
    %v332 = vstv %s331
    %v333 = vmul.f32 %v324, %v332
    %v334 = vmul.f32 %v321, %v332
    %v335 = vadd.f32 %v267, %v333
    %v336 = vadd.f32 %v268, %v334
    %s337 = sld [smem:[#allocation7 + $0x4]]
    %v338 = vstv %s337
    %v339 = vmul.f32 %v193, %v338
    %v340 = vmul.f32 %v194, %v338
    %v341 = vadd.f32 %v335, %v339
    %v342 = vadd.f32 %v336, %v340
    %s343 = sld [smem:[#allocation7 + $0x5]]
    %v344 = vstv %s343
    %v345 = vmul.f32 %v327, %v344
    %v346 = vmul.f32 %v330, %v344
    %v347 = vadd.f32 %v341, %v345
    %v348 = vadd.f32 %v342, %v346
    %s349 = sld [smem:[#allocation7 + $0xf]]
    %v350 = vstv %s349
    %v351 = vmul.f32 %v324, %v350
    %v352 = vmul.f32 %v321, %v350
    %v353 = vadd.f32 %v283, %v351
    %v354 = vadd.f32 %v284, %v352
    %s355 = sld [smem:[#allocation7 + $0x10]]
    %v356 = vstv %s355
    %v357 = vmul.f32 %v193, %v356
    %v358 = vmul.f32 %v194, %v356
    %v359 = vadd.f32 %v353, %v357
    %v360 = vadd.f32 %v354, %v358
    %s361 = sld [smem:[#allocation7 + $0x11]]
    %v362 = vstv %s361
    %v363 = vmul.f32 %v327, %v362
    %v364 = vmul.f32 %v330, %v362
    %v365 = vadd.f32 %v359, %v363
    %v366 = vadd.f32 %v360, %v364
    %s367 = sld [smem:[#allocation7 + $0x1b]]
    %v368 = vstv %s367
    %v369 = vmul.f32 %v324, %v368
    %v370 = vmul.f32 %v321, %v368
    %v371 = vadd.f32 %v299, %v369
    %v372 = vadd.f32 %v300, %v370
    %s373 = sld [smem:[#allocation7 + $0x1c]]
    %v374 = vstv %s373
    %v375 = vmul.f32 %v193, %v374
    %v376 = vmul.f32 %v194, %v374
    %v377 = vadd.f32 %v371, %v375
    %v378 = vadd.f32 %v372, %v376
    %s379 = sld [smem:[#allocation7 + $0x1d]]
    %v380 = vstv %s379
    %v381 = vmul.f32 %v327, %v380
    %v382 = vmul.f32 %v330, %v380
    %v383 = vadd.f32 %v377, %v381
    %v384 = vadd.f32 %v378, %v382
    %s385 = sld [smem:[#allocation7 + $0x27]]
    %v386 = vstv %s385
    %v387 = vmul.f32 %v324, %v386
    %v388 = vmul.f32 %v321, %v386
    %v389 = vadd.f32 %v315, %v387
    %v390 = vadd.f32 %v316, %v388
    %s391 = sld [smem:[#allocation7 + $0x28]]
    %v392 = vstv %s391
    %v393 = vmul.f32 %v193, %v392
    %v394 = vmul.f32 %v194, %v392
    %v395 = vadd.f32 %v389, %v393
    %v396 = vadd.f32 %v390, %v394
    %s397 = sld [smem:[#allocation7 + $0x29]]
    %v398 = vstv %s397
    %v399 = vmul.f32 %v327, %v398
    %v400 = vmul.f32 %v330, %v398
    %v401 = vadd.f32 %v395, %v399
    %v402 = vadd.f32 %v396, %v400
    %v405 = vrot.slane %v215, 7
    %v406 = vrot.slane %v216, 7
    %v407 = vsel %vm137, %v405, %v406
    %v410 = vsel %vm137, 0.0, %v405
    %v411 = vrot.slane %v215, 1
    %v412 = vrot.slane %v216, 1
    %v413 = vsel %vm144, %v411, %v412
    %v416 = vsel %vm144, %v412, 0.0
    %s417 = sld [smem:[#allocation7 + $0x6]]
    %v418 = vstv %s417
    %v419 = vmul.f32 %v410, %v418
    %v420 = vmul.f32 %v407, %v418
    %v421 = vadd.f32 %v347, %v419
    %v422 = vadd.f32 %v348, %v420
    %s423 = sld [smem:[#allocation7 + $0x7]]
    %v424 = vstv %s423
    %v425 = vmul.f32 %v215, %v424
    %v426 = vmul.f32 %v216, %v424
    %v427 = vadd.f32 %v421, %v425
    %v428 = vadd.f32 %v422, %v426
    %s429 = sld [smem:[#allocation7 + $0x8]]
    %v430 = vstv %s429
    %v431 = vmul.f32 %v413, %v430
    %v432 = vmul.f32 %v416, %v430
    %v433 = vadd.f32 %v427, %v431
    %v434 = vadd.f32 %v428, %v432
    %s435 = sld [smem:[#allocation7 + $0x12]]
    %v436 = vstv %s435
    %v437 = vmul.f32 %v410, %v436
    %v438 = vmul.f32 %v407, %v436
    %v439 = vadd.f32 %v365, %v437
    %v440 = vadd.f32 %v366, %v438
    %s441 = sld [smem:[#allocation7 + $0x13]]
    %v442 = vstv %s441
    %v443 = vmul.f32 %v215, %v442
    %v444 = vmul.f32 %v216, %v442
    %v445 = vadd.f32 %v439, %v443
    %v446 = vadd.f32 %v440, %v444
    %s447 = sld [smem:[#allocation7 + $0x14]]
    %v448 = vstv %s447
    %v449 = vmul.f32 %v413, %v448
    %v450 = vmul.f32 %v416, %v448
    %v451 = vadd.f32 %v445, %v449
    %v452 = vadd.f32 %v446, %v450
    %s453 = sld [smem:[#allocation7 + $0x1e]]
    %v454 = vstv %s453
    %v455 = vmul.f32 %v410, %v454
    %v456 = vmul.f32 %v407, %v454
    %v457 = vadd.f32 %v383, %v455
    %v458 = vadd.f32 %v384, %v456
    %s459 = sld [smem:[#allocation7 + $0x1f]]
    %v460 = vstv %s459
    %v461 = vmul.f32 %v215, %v460
    %v462 = vmul.f32 %v216, %v460
    %v463 = vadd.f32 %v457, %v461
    %v464 = vadd.f32 %v458, %v462
    %s465 = sld [smem:[#allocation7 + $0x20]]
    %v466 = vstv %s465
    %v467 = vmul.f32 %v413, %v466
    %v468 = vmul.f32 %v416, %v466
    %v469 = vadd.f32 %v463, %v467
    %v470 = vadd.f32 %v464, %v468
    %s471 = sld [smem:[#allocation7 + $0x2a]]
    %v472 = vstv %s471
    %v473 = vmul.f32 %v410, %v472
    %v474 = vmul.f32 %v407, %v472
    %v475 = vadd.f32 %v401, %v473
    %v476 = vadd.f32 %v402, %v474
    %s477 = sld [smem:[#allocation7 + $0x2b]]
    %v478 = vstv %s477
    %v479 = vmul.f32 %v215, %v478
    %v480 = vmul.f32 %v216, %v478
    %v481 = vadd.f32 %v475, %v479
    %v482 = vadd.f32 %v476, %v480
    %s483 = sld [smem:[#allocation7 + $0x2c]]
    %v484 = vstv %s483
    %v485 = vmul.f32 %v413, %v484
    %v486 = vmul.f32 %v416, %v484
    %v487 = vadd.f32 %v481, %v485
    %v488 = vadd.f32 %v482, %v486
    %v491 = vrot.slane %v237, 7
    %v492 = vrot.slane %v238, 7
    %v493 = vsel %vm137, %v491, %v492
    %v496 = vsel %vm137, 0.0, %v491
    %v497 = vrot.slane %v237, 1
    %v498 = vrot.slane %v238, 1
    %v499 = vsel %vm144, %v497, %v498
    %v502 = vsel %vm144, %v498, 0.0
    %s503 = sld [smem:[#allocation7 + $0x9]]
    %v504 = vstv %s503
    %v505 = vmul.f32 %v496, %v504
    %v506 = vmul.f32 %v493, %v504
    %v507 = vadd.f32 %v433, %v505
    %v508 = vadd.f32 %v434, %v506
    %s509 = sld [smem:[#allocation7 + $0xa]]
    %v510 = vstv %s509
    %v511 = vmul.f32 %v237, %v510
    %v512 = vmul.f32 %v238, %v510
    %v513 = vadd.f32 %v507, %v511
    %v514 = vadd.f32 %v508, %v512
    %s515 = sld [smem:[#allocation7 + $0xb]]
    %v516 = vstv %s515
    %v517 = vmul.f32 %v499, %v516
    %v518 = vmul.f32 %v502, %v516
    %v519 = vadd.f32 %v513, %v517
    %v520 = vadd.f32 %v514, %v518
    %s521 = sld [smem:[#allocation7 + $0x15]]
    %v522 = vstv %s521
    %v523 = vmul.f32 %v496, %v522
    %v524 = vmul.f32 %v493, %v522
    %v525 = vadd.f32 %v451, %v523
    %v526 = vadd.f32 %v452, %v524
    %s527 = sld [smem:[#allocation7 + $0x16]]
    %v528 = vstv %s527
    %v529 = vmul.f32 %v237, %v528
    %v530 = vmul.f32 %v238, %v528
    %v531 = vadd.f32 %v525, %v529
    %v532 = vadd.f32 %v526, %v530
    %s533 = sld [smem:[#allocation7 + $0x17]]
    %v534 = vstv %s533
    %v535 = vmul.f32 %v499, %v534
    %v536 = vmul.f32 %v502, %v534
    %v537 = vadd.f32 %v531, %v535
    %v538 = vadd.f32 %v532, %v536
    %s539 = sld [smem:[#allocation7 + $0x21]]
    %v540 = vstv %s539
    %v541 = vmul.f32 %v496, %v540
    %v542 = vmul.f32 %v493, %v540
    %v543 = vadd.f32 %v469, %v541
    %v544 = vadd.f32 %v470, %v542
    %s545 = sld [smem:[#allocation7 + $0x22]]
    %v546 = vstv %s545
    %v547 = vmul.f32 %v237, %v546
    %v548 = vmul.f32 %v238, %v546
    %v549 = vadd.f32 %v543, %v547
    %v550 = vadd.f32 %v544, %v548
    %s551 = sld [smem:[#allocation7 + $0x23]]
    %v552 = vstv %s551
    %v553 = vmul.f32 %v499, %v552
    %v554 = vmul.f32 %v502, %v552
    %v555 = vadd.f32 %v549, %v553
    %v556 = vadd.f32 %v550, %v554
    %s557 = sld [smem:[#allocation7 + $0x2d]]
    %v558 = vstv %s557
    %v559 = vmul.f32 %v496, %v558
    %v560 = vmul.f32 %v493, %v558
    %v561 = vadd.f32 %v487, %v559
    %v562 = vadd.f32 %v488, %v560
    %s563 = sld [smem:[#allocation7 + $0x2e]]
    %v564 = vstv %s563
    %v565 = vmul.f32 %v237, %v564
    %v566 = vmul.f32 %v238, %v564
    %v567 = vadd.f32 %v561, %v565
    %v568 = vadd.f32 %v562, %v566
    %s569 = sld [smem:[#allocation7 + $0x2f]]
    %v570 = vstv %s569
    %v571 = vmul.f32 %v499, %v570
    %v572 = vmul.f32 %v502, %v570
    %v573 = vadd.f32 %v567, %v571
    %v574 = vadd.f32 %v568, %v572
    %s575 = sld [smem:[#allocation8]]
    %v576 = vstv %s575
    %v577 = vadd.f32 %v519, %v576
    %v578 = vadd.f32 %v520, %v576
    %v579 = vadd.f32 %v577, %v171
    %v580 = vadd.f32 %v578, %v172
    %v581 = vmax.f32 %v579, 0.0
    %v582 = vmax.f32 %v580, 0.0
    %s583 = sld [smem:[#allocation8 + $0x1]]
    %v584 = vstv %s583
    %v585 = vadd.f32 %v537, %v584
    %v586 = vadd.f32 %v538, %v584
    %v587 = vadd.f32 %v585, %v193
    %v588 = vadd.f32 %v586, %v194
    %v589 = vmax.f32 %v587, 0.0
    %v590 = vmax.f32 %v588, 0.0
    %s591 = sld [smem:[#allocation8 + $0x2]]
    %v592 = vstv %s591
    %v593 = vadd.f32 %v555, %v592
    %v594 = vadd.f32 %v556, %v592
    %v595 = vadd.f32 %v593, %v215
    %v596 = vadd.f32 %v594, %v216
    %v597 = vmax.f32 %v595, 0.0
    %v598 = vmax.f32 %v596, 0.0
    %s599 = sld [smem:[#allocation8 + $0x3]]
    %v600 = vstv %s599
    %v601 = vadd.f32 %v573, %v600
    %v602 = vadd.f32 %v574, %v600
    %v603 = vadd.f32 %v601, %v237
    %v604 = vadd.f32 %v602, %v238
    %v605 = vmax.f32 %v603, 0.0
    %v606 = vmax.f32 %v604, 0.0
    %v609 = vrot.slane %v581, 7
    %v610 = vrot.slane %v582, 7
    %v611 = vsel %vm137, %v609, %v610
    %v614 = vsel %vm137, 0.0, %v609
    %v615 = vrot.slane %v581, 1
    %v616 = vrot.slane %v582, 1
    %v617 = vsel %vm144, %v615, %v616
    %v620 = vsel %vm144, %v616, 0.0
    %s621 = sld [smem:[#allocation10]]
    %v622 = vstv %s621
    %v623 = vmul.f32 %v614, %v622
    %v624 = vmul.f32 %v611, %v622
    %s625 = sld [smem:[#allocation10 + $0x1]]
    %v626 = vstv %s625
    %v627 = vmul.f32 %v581, %v626
    %v628 = vmul.f32 %v582, %v626
    %v629 = vadd.f32 %v623, %v627
    %v630 = vadd.f32 %v624, %v628
    %s631 = sld [smem:[#allocation10 + $0x2]]
    %v632 = vstv %s631
    %v633 = vmul.f32 %v617, %v632
    %v634 = vmul.f32 %v620, %v632
    %v635 = vadd.f32 %v629, %v633
    %v636 = vadd.f32 %v630, %v634
    %s637 = sld [smem:[#allocation10 + $0xc]]
    %v638 = vstv %s637
    %v639 = vmul.f32 %v614, %v638
    %v640 = vmul.f32 %v611, %v638
    %s641 = sld [smem:[#allocation10 + $0xd]]
    %v642 = vstv %s641
    %v643 = vmul.f32 %v581, %v642
    %v644 = vmul.f32 %v582, %v642
    %v645 = vadd.f32 %v639, %v643
    %v646 = vadd.f32 %v640, %v644
    %s647 = sld [smem:[#allocation10 + $0xe]]
    %v648 = vstv %s647
    %v649 = vmul.f32 %v617, %v648
    %v650 = vmul.f32 %v620, %v648
    %v651 = vadd.f32 %v645, %v649
    %v652 = vadd.f32 %v646, %v650
    %s653 = sld [smem:[#allocation10 + $0x18]]
    %v654 = vstv %s653
    %v655 = vmul.f32 %v614, %v654
    %v656 = vmul.f32 %v611, %v654
    %s657 = sld [smem:[#allocation10 + $0x19]]
    %v658 = vstv %s657
    %v659 = vmul.f32 %v581, %v658
    %v660 = vmul.f32 %v582, %v658
    %v661 = vadd.f32 %v655, %v659
    %v662 = vadd.f32 %v656, %v660
    %s663 = sld [smem:[#allocation10 + $0x1a]]
    %v664 = vstv %s663
    %v665 = vmul.f32 %v617, %v664
    %v666 = vmul.f32 %v620, %v664
    %v667 = vadd.f32 %v661, %v665
    %v668 = vadd.f32 %v662, %v666
    %s669 = sld [smem:[#allocation10 + $0x24]]
    %v670 = vstv %s669
    %v671 = vmul.f32 %v614, %v670
    %v672 = vmul.f32 %v611, %v670
    %s673 = sld [smem:[#allocation10 + $0x25]]
    %v674 = vstv %s673
    %v675 = vmul.f32 %v581, %v674
    %v676 = vmul.f32 %v582, %v674
    %v677 = vadd.f32 %v671, %v675
    %v678 = vadd.f32 %v672, %v676
    %s679 = sld [smem:[#allocation10 + $0x26]]
    %v680 = vstv %s679
    %v681 = vmul.f32 %v617, %v680
    %v682 = vmul.f32 %v620, %v680
    %v683 = vadd.f32 %v677, %v681
    %v684 = vadd.f32 %v678, %v682
    %v687 = vrot.slane %v589, 7
    %v688 = vrot.slane %v590, 7
    %v689 = vsel %vm137, %v687, %v688
    %v692 = vsel %vm137, 0.0, %v687
    %v693 = vrot.slane %v589, 1
    %v694 = vrot.slane %v590, 1
    %v695 = vsel %vm144, %v693, %v694
    %v698 = vsel %vm144, %v694, 0.0
    %s699 = sld [smem:[#allocation10 + $0x3]]
    %v700 = vstv %s699
    %v701 = vmul.f32 %v692, %v700
    %v702 = vmul.f32 %v689, %v700
    %v703 = vadd.f32 %v635, %v701
    %v704 = vadd.f32 %v636, %v702
    %s705 = sld [smem:[#allocation10 + $0x4]]
    %v706 = vstv %s705
    %v707 = vmul.f32 %v589, %v706
    %v708 = vmul.f32 %v590, %v706
    %v709 = vadd.f32 %v703, %v707
    %v710 = vadd.f32 %v704, %v708
    %s711 = sld [smem:[#allocation10 + $0x5]]
    %v712 = vstv %s711
    %v713 = vmul.f32 %v695, %v712
    %v714 = vmul.f32 %v698, %v712
    %v715 = vadd.f32 %v709, %v713
    %v716 = vadd.f32 %v710, %v714
    %s717 = sld [smem:[#allocation10 + $0xf]]
    %v718 = vstv %s717
    %v719 = vmul.f32 %v692, %v718
    %v720 = vmul.f32 %v689, %v718
    %v721 = vadd.f32 %v651, %v719
    %v722 = vadd.f32 %v652, %v720
    %s723 = sld [smem:[#allocation10 + $0x10]]
    %v724 = vstv %s723
    %v725 = vmul.f32 %v589, %v724
    %v726 = vmul.f32 %v590, %v724
    %v727 = vadd.f32 %v721, %v725
    %v728 = vadd.f32 %v722, %v726
    %s729 = sld [smem:[#allocation10 + $0x11]]
    %v730 = vstv %s729
    %v731 = vmul.f32 %v695, %v730
    %v732 = vmul.f32 %v698, %v730
    %v733 = vadd.f32 %v727, %v731
    %v734 = vadd.f32 %v728, %v732
    %s735 = sld [smem:[#allocation10 + $0x1b]]
    %v736 = vstv %s735
    %v737 = vmul.f32 %v692, %v736
    %v738 = vmul.f32 %v689, %v736
    %v739 = vadd.f32 %v667, %v737
    %v740 = vadd.f32 %v668, %v738
    %s741 = sld [smem:[#allocation10 + $0x1c]]
    %v742 = vstv %s741
    %v743 = vmul.f32 %v589, %v742
    %v744 = vmul.f32 %v590, %v742
    %v745 = vadd.f32 %v739, %v743
    %v746 = vadd.f32 %v740, %v744
    %s747 = sld [smem:[#allocation10 + $0x1d]]
    %v748 = vstv %s747
    %v749 = vmul.f32 %v695, %v748
    %v750 = vmul.f32 %v698, %v748
    %v751 = vadd.f32 %v745, %v749
    %v752 = vadd.f32 %v746, %v750
    %s753 = sld [smem:[#allocation10 + $0x27]]
    %v754 = vstv %s753
    %v755 = vmul.f32 %v692, %v754
    %v756 = vmul.f32 %v689, %v754
    %v757 = vadd.f32 %v683, %v755
    %v758 = vadd.f32 %v684, %v756
    %s759 = sld [smem:[#allocation10 + $0x28]]
    %v760 = vstv %s759
    %v761 = vmul.f32 %v589, %v760
    %v762 = vmul.f32 %v590, %v760
    %v763 = vadd.f32 %v757, %v761
    %v764 = vadd.f32 %v758, %v762
    %s765 = sld [smem:[#allocation10 + $0x29]]
    %v766 = vstv %s765
    %v767 = vmul.f32 %v695, %v766
    %v768 = vmul.f32 %v698, %v766
    %v769 = vadd.f32 %v763, %v767
    %v770 = vadd.f32 %v764, %v768
    %v773 = vrot.slane %v597, 7
    %v774 = vrot.slane %v598, 7
    %v775 = vsel %vm137, %v773, %v774
    %v778 = vsel %vm137, 0.0, %v773
    %v779 = vrot.slane %v597, 1
    %v780 = vrot.slane %v598, 1
    %v781 = vsel %vm144, %v779, %v780
    %v784 = vsel %vm144, %v780, 0.0
    %s785 = sld [smem:[#allocation10 + $0x6]]
    %v786 = vstv %s785
    %v787 = vmul.f32 %v778, %v786
    %v788 = vmul.f32 %v775, %v786
    %v789 = vadd.f32 %v715, %v787
    %v790 = vadd.f32 %v716, %v788
    %s791 = sld [smem:[#allocation10 + $0x7]]
    %v792 = vstv %s791
    %v793 = vmul.f32 %v597, %v792
    %v794 = vmul.f32 %v598, %v792
    %v795 = vadd.f32 %v789, %v793
    %v796 = vadd.f32 %v790, %v794
    %s797 = sld [smem:[#allocation10 + $0x8]]
    %v798 = vstv %s797
    %v799 = vmul.f32 %v781, %v798
    %v800 = vmul.f32 %v784, %v798
    %v801 = vadd.f32 %v795, %v799
    %v802 = vadd.f32 %v796, %v800
    %s803 = sld [smem:[#allocation10 + $0x12]]
    %v804 = vstv %s803
    %v805 = vmul.f32 %v778, %v804
    %v806 = vmul.f32 %v775, %v804
    %v807 = vadd.f32 %v733, %v805
    %v808 = vadd.f32 %v734, %v806
    %s809 = sld [smem:[#allocation10 + $0x13]]
    %v810 = vstv %s809
    %v811 = vmul.f32 %v597, %v810
    %v812 = vmul.f32 %v598, %v810
    %v813 = vadd.f32 %v807, %v811
    %v814 = vadd.f32 %v808, %v812
    %s815 = sld [smem:[#allocation10 + $0x14]]
    %v816 = vstv %s815
    %v817 = vmul.f32 %v781, %v816
    %v818 = vmul.f32 %v784, %v816
    %v819 = vadd.f32 %v813, %v817
    %v820 = vadd.f32 %v814, %v818
    %s821 = sld [smem:[#allocation10 + $0x1e]]
    %v822 = vstv %s821
    %v823 = vmul.f32 %v778, %v822
    %v824 = vmul.f32 %v775, %v822
    %v825 = vadd.f32 %v751, %v823
    %v826 = vadd.f32 %v752, %v824
    %s827 = sld [smem:[#allocation10 + $0x1f]]
    %v828 = vstv %s827
    %v829 = vmul.f32 %v597, %v828
    %v830 = vmul.f32 %v598, %v828
    %v831 = vadd.f32 %v825, %v829
    %v832 = vadd.f32 %v826, %v830
    %s833 = sld [smem:[#allocation10 + $0x20]]
    %v834 = vstv %s833
    %v835 = vmul.f32 %v781, %v834
    %v836 = vmul.f32 %v784, %v834
    %v837 = vadd.f32 %v831, %v835
    %v838 = vadd.f32 %v832, %v836
    %s839 = sld [smem:[#allocation10 + $0x2a]]
    %v840 = vstv %s839
    %v841 = vmul.f32 %v778, %v840
    %v842 = vmul.f32 %v775, %v840
    %v843 = vadd.f32 %v769, %v841
    %v844 = vadd.f32 %v770, %v842
    %s845 = sld [smem:[#allocation10 + $0x2b]]
    %v846 = vstv %s845
    %v847 = vmul.f32 %v597, %v846
    %v848 = vmul.f32 %v598, %v846
    %v849 = vadd.f32 %v843, %v847
    %v850 = vadd.f32 %v844, %v848
    %s851 = sld [smem:[#allocation10 + $0x2c]]
    %v852 = vstv %s851
    %v853 = vmul.f32 %v781, %v852
    %v854 = vmul.f32 %v784, %v852
    %v855 = vadd.f32 %v849, %v853
    %v856 = vadd.f32 %v850, %v854
    %v859 = vrot.slane %v605, 7
    %v860 = vrot.slane %v606, 7
    %v861 = vsel %vm137, %v859, %v860
    %v864 = vsel %vm137, 0.0, %v859
    %v865 = vrot.slane %v605, 1
    %v866 = vrot.slane %v606, 1
    %v867 = vsel %vm144, %v865, %v866
    %v870 = vsel %vm144, %v866, 0.0
    %s871 = sld [smem:[#allocation10 + $0x9]]
    %v872 = vstv %s871
    %v873 = vmul.f32 %v864, %v872
    %v874 = vmul.f32 %v861, %v872
    %v875 = vadd.f32 %v801, %v873
    %v876 = vadd.f32 %v802, %v874
    %s877 = sld [smem:[#allocation10 + $0xa]]
    %v878 = vstv %s877
    %v879 = vmul.f32 %v605, %v878
    %v880 = vmul.f32 %v606, %v878
    %v881 = vadd.f32 %v875, %v879
    %v882 = vadd.f32 %v876, %v880
    %s883 = sld [smem:[#allocation10 + $0xb]]
    %v884 = vstv %s883
    %v885 = vmul.f32 %v867, %v884
    %v886 = vmul.f32 %v870, %v884
    %v887 = vadd.f32 %v881, %v885
    %v888 = vadd.f32 %v882, %v886
    %s889 = sld [smem:[#allocation10 + $0x15]]
    %v890 = vstv %s889
    %v891 = vmul.f32 %v864, %v890
    %v892 = vmul.f32 %v861, %v890
    %v893 = vadd.f32 %v819, %v891
    %v894 = vadd.f32 %v820, %v892
    %s895 = sld [smem:[#allocation10 + $0x16]]
    %v896 = vstv %s895
    %v897 = vmul.f32 %v605, %v896
    %v898 = vmul.f32 %v606, %v896
    %v899 = vadd.f32 %v893, %v897
    %v900 = vadd.f32 %v894, %v898
    %s901 = sld [smem:[#allocation10 + $0x17]]
    %v902 = vstv %s901
    %v903 = vmul.f32 %v867, %v902
    %v904 = vmul.f32 %v870, %v902
    %v905 = vadd.f32 %v899, %v903
    %v906 = vadd.f32 %v900, %v904
    %s907 = sld [smem:[#allocation10 + $0x21]]
    %v908 = vstv %s907
    %v909 = vmul.f32 %v864, %v908
    %v910 = vmul.f32 %v861, %v908
    %v911 = vadd.f32 %v837, %v909
    %v912 = vadd.f32 %v838, %v910
    %s913 = sld [smem:[#allocation10 + $0x22]]
    %v914 = vstv %s913
    %v915 = vmul.f32 %v605, %v914
    %v916 = vmul.f32 %v606, %v914
    %v917 = vadd.f32 %v911, %v915
    %v918 = vadd.f32 %v912, %v916
    %s919 = sld [smem:[#allocation10 + $0x23]]
    %v920 = vstv %s919
    %v921 = vmul.f32 %v867, %v920
    %v922 = vmul.f32 %v870, %v920
    %v923 = vadd.f32 %v917, %v921
    %v924 = vadd.f32 %v918, %v922
    %s925 = sld [smem:[#allocation10 + $0x2d]]
    %v926 = vstv %s925
    %v927 = vmul.f32 %v864, %v926
    %v928 = vmul.f32 %v861, %v926
    %v929 = vadd.f32 %v855, %v927
    %v930 = vadd.f32 %v856, %v928
    %s931 = sld [smem:[#allocation10 + $0x2e]]
    %v932 = vstv %s931
    %v933 = vmul.f32 %v605, %v932
    %v934 = vmul.f32 %v606, %v932
    %v935 = vadd.f32 %v929, %v933
    %v936 = vadd.f32 %v930, %v934
    %s937 = sld [smem:[#allocation10 + $0x2f]]
    %v938 = vstv %s937
    %v939 = vmul.f32 %v867, %v938
    %v940 = vmul.f32 %v870, %v938
    %v941 = vadd.f32 %v935, %v939
    %v942 = vadd.f32 %v936, %v940
    %s943 = sld [smem:[#allocation11]]
    %v944 = vstv %s943
    %v945 = vadd.f32 %v887, %v944
    %v946 = vadd.f32 %v888, %v944
    %v947 = vadd.f32 %v945, %v581
    %v948 = vadd.f32 %v946, %v582
    %v949 = vmax.f32 %v947, 0.0
    %v950 = vmax.f32 %v948, 0.0
    %s951 = sld [smem:[#allocation11 + $0x1]]
    %v952 = vstv %s951
    %v953 = vadd.f32 %v905, %v952
    %v954 = vadd.f32 %v906, %v952
    %v955 = vadd.f32 %v953, %v589
    %v956 = vadd.f32 %v954, %v590
    %v957 = vmax.f32 %v955, 0.0
    %v958 = vmax.f32 %v956, 0.0
    %s959 = sld [smem:[#allocation11 + $0x2]]
    %v960 = vstv %s959
    %v961 = vadd.f32 %v923, %v960
    %v962 = vadd.f32 %v924, %v960
    %v963 = vadd.f32 %v961, %v597
    %v964 = vadd.f32 %v962, %v598
    %v965 = vmax.f32 %v963, 0.0
    %v966 = vmax.f32 %v964, 0.0
    %s967 = sld [smem:[#allocation11 + $0x3]]
    %v968 = vstv %s967
    %v969 = vadd.f32 %v941, %v968
    %v970 = vadd.f32 %v942, %v968
    %v971 = vadd.f32 %v969, %v605
    %v972 = vadd.f32 %v970, %v606
    %v973 = vmax.f32 %v971, 0.0
    %v974 = vmax.f32 %v972, 0.0
    %v977 = vrot.slane %v949, 7
    %v978 = vrot.slane %v950, 7
    %v979 = vsel %vm137, %v977, %v978
    %v982 = vsel %vm137, 0.0, %v977
    %v983 = vrot.slane %v949, 1
    %v984 = vrot.slane %v950, 1
    %v985 = vsel %vm144, %v983, %v984
    %v988 = vsel %vm144, %v984, 0.0
    %s989 = sld [smem:[#allocation13]]
    %v990 = vstv %s989
    %v991 = vmul.f32 %v982, %v990
    %v992 = vmul.f32 %v979, %v990
    %s993 = sld [smem:[#allocation13 + $0x1]]
    %v994 = vstv %s993
    %v995 = vmul.f32 %v949, %v994
    %v996 = vmul.f32 %v950, %v994
    %v997 = vadd.f32 %v991, %v995
    %v998 = vadd.f32 %v992, %v996
    %s999 = sld [smem:[#allocation13 + $0x2]]
    %v1000 = vstv %s999
    %v1001 = vmul.f32 %v985, %v1000
    %v1002 = vmul.f32 %v988, %v1000
    %v1003 = vadd.f32 %v997, %v1001
    %v1004 = vadd.f32 %v998, %v1002
    %s1005 = sld [smem:[#allocation13 + $0xc]]
    %v1006 = vstv %s1005
    %v1007 = vmul.f32 %v982, %v1006
    %v1008 = vmul.f32 %v979, %v1006
    %s1009 = sld [smem:[#allocation13 + $0xd]]
    %v1010 = vstv %s1009
    %v1011 = vmul.f32 %v949, %v1010
    %v1012 = vmul.f32 %v950, %v1010
    %v1013 = vadd.f32 %v1007, %v1011
    %v1014 = vadd.f32 %v1008, %v1012
    %s1015 = sld [smem:[#allocation13 + $0xe]]
    %v1016 = vstv %s1015
    %v1017 = vmul.f32 %v985, %v1016
    %v1018 = vmul.f32 %v988, %v1016
    %v1019 = vadd.f32 %v1013, %v1017
    %v1020 = vadd.f32 %v1014, %v1018
    %s1021 = sld [smem:[#allocation13 + $0x18]]
    %v1022 = vstv %s1021
    %v1023 = vmul.f32 %v982, %v1022
    %v1024 = vmul.f32 %v979, %v1022
    %s1025 = sld [smem:[#allocation13 + $0x19]]
    %v1026 = vstv %s1025
    %v1027 = vmul.f32 %v949, %v1026
    %v1028 = vmul.f32 %v950, %v1026
    %v1029 = vadd.f32 %v1023, %v1027
    %v1030 = vadd.f32 %v1024, %v1028
    %s1031 = sld [smem:[#allocation13 + $0x1a]]
    %v1032 = vstv %s1031
    %v1033 = vmul.f32 %v985, %v1032
    %v1034 = vmul.f32 %v988, %v1032
    %v1035 = vadd.f32 %v1029, %v1033
    %v1036 = vadd.f32 %v1030, %v1034
    %s1037 = sld [smem:[#allocation13 + $0x24]]
    %v1038 = vstv %s1037
    %v1039 = vmul.f32 %v982, %v1038
    %v1040 = vmul.f32 %v979, %v1038
    %s1041 = sld [smem:[#allocation13 + $0x25]]
    %v1042 = vstv %s1041
    %v1043 = vmul.f32 %v949, %v1042
    %v1044 = vmul.f32 %v950, %v1042
    %v1045 = vadd.f32 %v1039, %v1043
    %v1046 = vadd.f32 %v1040, %v1044
    %s1047 = sld [smem:[#allocation13 + $0x26]]
    %v1048 = vstv %s1047
    %v1049 = vmul.f32 %v985, %v1048
    %v1050 = vmul.f32 %v988, %v1048
    %v1051 = vadd.f32 %v1045, %v1049
    %v1052 = vadd.f32 %v1046, %v1050
    %v1055 = vrot.slane %v957, 7
    %v1056 = vrot.slane %v958, 7
    %v1057 = vsel %vm137, %v1055, %v1056
    %v1060 = vsel %vm137, 0.0, %v1055
    %v1061 = vrot.slane %v957, 1
    %v1062 = vrot.slane %v958, 1
    %v1063 = vsel %vm144, %v1061, %v1062
    %v1066 = vsel %vm144, %v1062, 0.0
    %s1067 = sld [smem:[#allocation13 + $0x3]]
    %v1068 = vstv %s1067
    %v1069 = vmul.f32 %v1060, %v1068
    %v1070 = vmul.f32 %v1057, %v1068
    %v1071 = vadd.f32 %v1003, %v1069
    %v1072 = vadd.f32 %v1004, %v1070
    %s1073 = sld [smem:[#allocation13 + $0x4]]
    %v1074 = vstv %s1073
    %v1075 = vmul.f32 %v957, %v1074
    %v1076 = vmul.f32 %v958, %v1074
    %v1077 = vadd.f32 %v1071, %v1075
    %v1078 = vadd.f32 %v1072, %v1076
    %s1079 = sld [smem:[#allocation13 + $0x5]]
    %v1080 = vstv %s1079
    %v1081 = vmul.f32 %v1063, %v1080
    %v1082 = vmul.f32 %v1066, %v1080
    %v1083 = vadd.f32 %v1077, %v1081
    %v1084 = vadd.f32 %v1078, %v1082
    %s1085 = sld [smem:[#allocation13 + $0xf]]
    %v1086 = vstv %s1085
    %v1087 = vmul.f32 %v1060, %v1086
    %v1088 = vmul.f32 %v1057, %v1086
    %v1089 = vadd.f32 %v1019, %v1087
    %v1090 = vadd.f32 %v1020, %v1088
    %s1091 = sld [smem:[#allocation13 + $0x10]]
    %v1092 = vstv %s1091
    %v1093 = vmul.f32 %v957, %v1092
    %v1094 = vmul.f32 %v958, %v1092
    %v1095 = vadd.f32 %v1089, %v1093
    %v1096 = vadd.f32 %v1090, %v1094
    %s1097 = sld [smem:[#allocation13 + $0x11]]
    %v1098 = vstv %s1097
    %v1099 = vmul.f32 %v1063, %v1098
    %v1100 = vmul.f32 %v1066, %v1098
    %v1101 = vadd.f32 %v1095, %v1099
    %v1102 = vadd.f32 %v1096, %v1100
    %s1103 = sld [smem:[#allocation13 + $0x1b]]
    %v1104 = vstv %s1103
    %v1105 = vmul.f32 %v1060, %v1104
    %v1106 = vmul.f32 %v1057, %v1104
    %v1107 = vadd.f32 %v1035, %v1105
    %v1108 = vadd.f32 %v1036, %v1106
    %s1109 = sld [smem:[#allocation13 + $0x1c]]
    %v1110 = vstv %s1109
    %v1111 = vmul.f32 %v957, %v1110
    %v1112 = vmul.f32 %v958, %v1110
    %v1113 = vadd.f32 %v1107, %v1111
    %v1114 = vadd.f32 %v1108, %v1112
    %s1115 = sld [smem:[#allocation13 + $0x1d]]
    %v1116 = vstv %s1115
    %v1117 = vmul.f32 %v1063, %v1116
    %v1118 = vmul.f32 %v1066, %v1116
    %v1119 = vadd.f32 %v1113, %v1117
    %v1120 = vadd.f32 %v1114, %v1118
    %s1121 = sld [smem:[#allocation13 + $0x27]]
    %v1122 = vstv %s1121
    %v1123 = vmul.f32 %v1060, %v1122
    %v1124 = vmul.f32 %v1057, %v1122
    %v1125 = vadd.f32 %v1051, %v1123
    %v1126 = vadd.f32 %v1052, %v1124
    %s1127 = sld [smem:[#allocation13 + $0x28]]
    %v1128 = vstv %s1127
    %v1129 = vmul.f32 %v957, %v1128
    %v1130 = vmul.f32 %v958, %v1128
    %v1131 = vadd.f32 %v1125, %v1129
    %v1132 = vadd.f32 %v1126, %v1130
    %s1133 = sld [smem:[#allocation13 + $0x29]]
    %v1134 = vstv %s1133
    %v1135 = vmul.f32 %v1063, %v1134
    %v1136 = vmul.f32 %v1066, %v1134
    %v1137 = vadd.f32 %v1131, %v1135
    %v1138 = vadd.f32 %v1132, %v1136
    %v1141 = vrot.slane %v965, 7
    %v1142 = vrot.slane %v966, 7
    %v1143 = vsel %vm137, %v1141, %v1142
    %v1146 = vsel %vm137, 0.0, %v1141
    %v1147 = vrot.slane %v965, 1
    %v1148 = vrot.slane %v966, 1
    %v1149 = vsel %vm144, %v1147, %v1148
    %v1152 = vsel %vm144, %v1148, 0.0
    %s1153 = sld [smem:[#allocation13 + $0x6]]
    %v1154 = vstv %s1153
    %v1155 = vmul.f32 %v1146, %v1154
    %v1156 = vmul.f32 %v1143, %v1154
    %v1157 = vadd.f32 %v1083, %v1155
    %v1158 = vadd.f32 %v1084, %v1156
    %s1159 = sld [smem:[#allocation13 + $0x7]]
    %v1160 = vstv %s1159
    %v1161 = vmul.f32 %v965, %v1160
    %v1162 = vmul.f32 %v966, %v1160
    %v1163 = vadd.f32 %v1157, %v1161
    %v1164 = vadd.f32 %v1158, %v1162
    %s1165 = sld [smem:[#allocation13 + $0x8]]
    %v1166 = vstv %s1165
    %v1167 = vmul.f32 %v1149, %v1166
    %v1168 = vmul.f32 %v1152, %v1166
    %v1169 = vadd.f32 %v1163, %v1167
    %v1170 = vadd.f32 %v1164, %v1168
    %s1171 = sld [smem:[#allocation13 + $0x12]]
    %v1172 = vstv %s1171
    %v1173 = vmul.f32 %v1146, %v1172
    %v1174 = vmul.f32 %v1143, %v1172
    %v1175 = vadd.f32 %v1101, %v1173
    %v1176 = vadd.f32 %v1102, %v1174
    %s1177 = sld [smem:[#allocation13 + $0x13]]
    %v1178 = vstv %s1177
    %v1179 = vmul.f32 %v965, %v1178
    %v1180 = vmul.f32 %v966, %v1178
    %v1181 = vadd.f32 %v1175, %v1179
    %v1182 = vadd.f32 %v1176, %v1180
    %s1183 = sld [smem:[#allocation13 + $0x14]]
    %v1184 = vstv %s1183
    %v1185 = vmul.f32 %v1149, %v1184
    %v1186 = vmul.f32 %v1152, %v1184
    %v1187 = vadd.f32 %v1181, %v1185
    %v1188 = vadd.f32 %v1182, %v1186
    %s1189 = sld [smem:[#allocation13 + $0x1e]]
    %v1190 = vstv %s1189
    %v1191 = vmul.f32 %v1146, %v1190
    %v1192 = vmul.f32 %v1143, %v1190
    %v1193 = vadd.f32 %v1119, %v1191
    %v1194 = vadd.f32 %v1120, %v1192
    %s1195 = sld [smem:[#allocation13 + $0x1f]]
    %v1196 = vstv %s1195
    %v1197 = vmul.f32 %v965, %v1196
    %v1198 = vmul.f32 %v966, %v1196
    %v1199 = vadd.f32 %v1193, %v1197
    %v1200 = vadd.f32 %v1194, %v1198
    %s1201 = sld [smem:[#allocation13 + $0x20]]
    %v1202 = vstv %s1201
    %v1203 = vmul.f32 %v1149, %v1202
    %v1204 = vmul.f32 %v1152, %v1202
    %v1205 = vadd.f32 %v1199, %v1203
    %v1206 = vadd.f32 %v1200, %v1204
    %s1207 = sld [smem:[#allocation13 + $0x2a]]
    %v1208 = vstv %s1207
    %v1209 = vmul.f32 %v1146, %v1208
    %v1210 = vmul.f32 %v1143, %v1208
    %v1211 = vadd.f32 %v1137, %v1209
    %v1212 = vadd.f32 %v1138, %v1210
    %s1213 = sld [smem:[#allocation13 + $0x2b]]
    %v1214 = vstv %s1213
    %v1215 = vmul.f32 %v965, %v1214
    %v1216 = vmul.f32 %v966, %v1214
    %v1217 = vadd.f32 %v1211, %v1215
    %v1218 = vadd.f32 %v1212, %v1216
    %s1219 = sld [smem:[#allocation13 + $0x2c]]
    %v1220 = vstv %s1219
    %v1221 = vmul.f32 %v1149, %v1220
    %v1222 = vmul.f32 %v1152, %v1220
    %v1223 = vadd.f32 %v1217, %v1221
    %v1224 = vadd.f32 %v1218, %v1222
    %v1227 = vrot.slane %v973, 7
    %v1228 = vrot.slane %v974, 7
    %v1229 = vsel %vm137, %v1227, %v1228
    %v1232 = vsel %vm137, 0.0, %v1227
    %v1233 = vrot.slane %v973, 1
    %v1234 = vrot.slane %v974, 1
    %v1235 = vsel %vm144, %v1233, %v1234
    %v1238 = vsel %vm144, %v1234, 0.0
    %s1239 = sld [smem:[#allocation13 + $0x9]]
    %v1240 = vstv %s1239
    %v1241 = vmul.f32 %v1232, %v1240
    %v1242 = vmul.f32 %v1229, %v1240
    %v1243 = vadd.f32 %v1169, %v1241
    %v1244 = vadd.f32 %v1170, %v1242
    %s1245 = sld [smem:[#allocation13 + $0xa]]
    %v1246 = vstv %s1245
    %v1247 = vmul.f32 %v973, %v1246
    %v1248 = vmul.f32 %v974, %v1246
    %v1249 = vadd.f32 %v1243, %v1247
    %v1250 = vadd.f32 %v1244, %v1248
    %s1251 = sld [smem:[#allocation13 + $0xb]]
    %v1252 = vstv %s1251
    %v1253 = vmul.f32 %v1235, %v1252
    %v1254 = vmul.f32 %v1238, %v1252
    %v1255 = vadd.f32 %v1249, %v1253
    %v1256 = vadd.f32 %v1250, %v1254
    %s1257 = sld [smem:[#allocation13 + $0x15]]
    %v1258 = vstv %s1257
    %v1259 = vmul.f32 %v1232, %v1258
    %v1260 = vmul.f32 %v1229, %v1258
    %v1261 = vadd.f32 %v1187, %v1259
    %v1262 = vadd.f32 %v1188, %v1260
    %s1263 = sld [smem:[#allocation13 + $0x16]]
    %v1264 = vstv %s1263
    %v1265 = vmul.f32 %v973, %v1264
    %v1266 = vmul.f32 %v974, %v1264
    %v1267 = vadd.f32 %v1261, %v1265
    %v1268 = vadd.f32 %v1262, %v1266
    %s1269 = sld [smem:[#allocation13 + $0x17]]
    %v1270 = vstv %s1269
    %v1271 = vmul.f32 %v1235, %v1270
    %v1272 = vmul.f32 %v1238, %v1270
    %v1273 = vadd.f32 %v1267, %v1271
    %v1274 = vadd.f32 %v1268, %v1272
    %s1275 = sld [smem:[#allocation13 + $0x21]]
    %v1276 = vstv %s1275
    %v1277 = vmul.f32 %v1232, %v1276
    %v1278 = vmul.f32 %v1229, %v1276
    %v1279 = vadd.f32 %v1205, %v1277
    %v1280 = vadd.f32 %v1206, %v1278
    %s1281 = sld [smem:[#allocation13 + $0x22]]
    %v1282 = vstv %s1281
    %v1283 = vmul.f32 %v973, %v1282
    %v1284 = vmul.f32 %v974, %v1282
    %v1285 = vadd.f32 %v1279, %v1283
    %v1286 = vadd.f32 %v1280, %v1284
    %s1287 = sld [smem:[#allocation13 + $0x23]]
    %v1288 = vstv %s1287
    %v1289 = vmul.f32 %v1235, %v1288
    %v1290 = vmul.f32 %v1238, %v1288
    %v1291 = vadd.f32 %v1285, %v1289
    %v1292 = vadd.f32 %v1286, %v1290
    %s1293 = sld [smem:[#allocation13 + $0x2d]]
    %v1294 = vstv %s1293
    %v1295 = vmul.f32 %v1232, %v1294
    %v1296 = vmul.f32 %v1229, %v1294
    %v1297 = vadd.f32 %v1223, %v1295
    %v1298 = vadd.f32 %v1224, %v1296
    %s1299 = sld [smem:[#allocation13 + $0x2e]]
    %v1300 = vstv %s1299
    %v1301 = vmul.f32 %v973, %v1300
    %v1302 = vmul.f32 %v974, %v1300
    %v1303 = vadd.f32 %v1297, %v1301
    %v1304 = vadd.f32 %v1298, %v1302
    %s1305 = sld [smem:[#allocation13 + $0x2f]]
    %v1306 = vstv %s1305
    %v1307 = vmul.f32 %v1235, %v1306
    %v1308 = vmul.f32 %v1238, %v1306
    %v1309 = vadd.f32 %v1303, %v1307
    %v1310 = vadd.f32 %v1304, %v1308
    %s1311 = sld [smem:[#allocation14]]
    %v1312 = vstv %s1311
    %v1313 = vadd.f32 %v1255, %v1312
    %v1314 = vadd.f32 %v1256, %v1312
    %v1315 = vadd.f32 %v1313, %v949
    %v1316 = vadd.f32 %v1314, %v950
    %v1317 = vmax.f32 %v1315, 0.0
    %v1318 = vmax.f32 %v1316, 0.0
    %s1319 = sld [smem:[#allocation14 + $0x1]]
    %v1320 = vstv %s1319
    %v1321 = vadd.f32 %v1273, %v1320
    %v1322 = vadd.f32 %v1274, %v1320
    %v1323 = vadd.f32 %v1321, %v957
    %v1324 = vadd.f32 %v1322, %v958
    %v1325 = vmax.f32 %v1323, 0.0
    %v1326 = vmax.f32 %v1324, 0.0
    %s1327 = sld [smem:[#allocation14 + $0x2]]
    %v1328 = vstv %s1327
    %v1329 = vadd.f32 %v1291, %v1328
    %v1330 = vadd.f32 %v1292, %v1328
    %v1331 = vadd.f32 %v1329, %v965
    %v1332 = vadd.f32 %v1330, %v966
    %v1333 = vmax.f32 %v1331, 0.0
    %v1334 = vmax.f32 %v1332, 0.0
    %s1335 = sld [smem:[#allocation14 + $0x3]]
    %v1336 = vstv %s1335
    %v1337 = vadd.f32 %v1309, %v1336
    %v1338 = vadd.f32 %v1310, %v1336
    %v1339 = vadd.f32 %v1337, %v973
    %v1340 = vadd.f32 %v1338, %v974
    %v1341 = vmax.f32 %v1339, 0.0
    %v1342 = vmax.f32 %v1340, 0.0
    %v1343 = vld [vmem:[%s9] sm:$0xff]
    %v1344 = vld [vmem:[%s9 + $0x8] sm:$0xff]
    %v1345 = vld [vmem:[%s9 + $0x10] sm:$0xff]
    %v1346 = vld [vmem:[%s9 + $0x18] sm:$0xff]
    %v1347 = vld [vmem:[%s10] sm:$0xff]
    %v1348 = vld [vmem:[%s10 + $0x8] sm:$0xff]
    %v1349 = vld [vmem:[%s10 + $0x10] sm:$0xff]
    %v1350 = vld [vmem:[%s10 + $0x18] sm:$0xff]
    %1352 = vset.pattern.permute.xlu0 0
    %1353 = vperm.xlu0 %1352, %v1347
    %v1354 = vpop.permute.xlu0 %1353
    %1357 = vset.pattern.permute.xlu0 0
    %1358 = vperm.xlu0 %1357, %v1348
    %v1359 = vpop.permute.xlu0 %1358
    %1362 = vset.pattern.permute.xlu0 0
    %1363 = vperm.xlu0 %1362, %v1349
    %v1364 = vpop.permute.xlu0 %1363
    %1367 = vset.pattern.permute.xlu0 0
    %1368 = vperm.xlu0 %1367, %v1350
    %v1369 = vpop.permute.xlu0 %1368
    %vm1371 = vcmask 523264
    %v1373 = vsel %vm1371, %v1343, 0
    %v1376 = vsel %vm1371, %v1344, 0
    %v1379 = vsel %vm1371, %v1345, 0
    %v1382 = vsel %vm1371, %v1346, 0
    %1384 = vmatprep.subr.mxu0 0.0
    %1385 = vmatpush1.msra.mxu0 %v1317
    %1386 = vmatprep.subr.mxu0 0.0
    %1387 = vmatpush1.msra.mxu0 %v1318
    %1388 = vmatprep.subr.mxu0 0.0
    %1389 = vmatpush1.msra.mxu0 %v1325
    %1390 = vmatprep.subr.mxu0 0.0
    %1391 = vmatpush1.msra.mxu0 %v1326
    %1392 = vmatprep.subr.mxu0 0.0
    %1393 = vmatpush1.msra.mxu0 %v1333
    %1394 = vmatprep.subr.mxu0 0.0
    %1395 = vmatpush1.msra.mxu0 %v1334
    %1396 = vmatprep.subr.mxu0 0.0
    %1397 = vmatpush1.msra.mxu0 %v1341
    %1398 = vmatprep.subr.mxu0 0.0
    %1399 = vmatpush1.msra.mxu0 %v1342
    %1400 = vmatprep.subr.mxu0 0.0
    %1401 = vmatpush1.msra.mxu0 0.0
    %1402 = vmatprep.subr.mxu0 0.0
    %1403 = vmatpush1.msra.mxu0 0.0
    %1404 = vmatprep.subr.mxu0 0.0
    %1405 = vmatpush1.msra.mxu0 0.0
    %1406 = vmatprep.subr.mxu0 0.0
    %1407 = vmatpush1.msra.mxu0 0.0
    %1408 = vmatprep.subr.mxu0 0.0
    %1409 = vmatpush1.msra.mxu0 0.0
    %1410 = vmatprep.subr.mxu0 0.0
    %1411 = vmatpush1.msra.mxu0 0.0
    %1412 = vmatprep.subr.mxu0 0.0
    %1413 = vmatpush1.msra.mxu0 0.0
    %1414 = vmatprep.subr.mxu0 0.0
    %1415 = vmatpush1.msra.mxu0 0.0
    %1416 = vmatprep.subr.mxu0 0.0
    %1417 = vmatpush1.msra.mxu0 0.0
    %1418 = vmatprep.subr.mxu0 0.0
    %1419 = vmatpush1.msra.mxu0 0.0
    %1420 = vmatprep.subr.mxu0 0.0
    %1421 = vmatpush1.msra.mxu0 0.0
    %1422 = vmatprep.subr.mxu0 0.0
    %1423 = vmatpush1.msra.mxu0 0.0
    %1424 = vmatprep.subr.mxu0 0.0
    %1425 = vmatpush1.msra.mxu0 0.0
    %1426 = vmatprep.subr.mxu0 0.0
    %1427 = vmatpush1.msra.mxu0 0.0
    %1428 = vmatprep.subr.mxu0 0.0
    %1429 = vmatpush1.msra.mxu0 0.0
    %1430 = vmatprep.subr.mxu0 0.0
    %1431 = vmatpush1.msra.mxu0 0.0
    %1432 = vmatprep.subr.mxu0 0.0
    %1433 = vmatpush1.msra.mxu0 0.0
    %1434 = vmatprep.subr.mxu0 0.0
    %1435 = vmatpush1.msra.mxu0 0.0
    %1436 = vmatprep.subr.mxu0 0.0
    %1437 = vmatpush1.msra.mxu0 0.0
    %1438 = vmatprep.subr.mxu0 0.0
    %1439 = vmatpush1.msra.mxu0 0.0
    %1440 = vmatprep.subr.mxu0 0.0
    %1441 = vmatpush1.msra.mxu0 0.0
    %1442 = vmatprep.subr.mxu0 0.0
    %1443 = vmatpush1.msra.mxu0 0.0
    %1444 = vmatprep.subr.mxu0 0.0
    %1445 = vmatpush1.msra.mxu0 0.0
    %1446 = vmatprep.subr.mxu0 0.0
    %1447 = vmatpush1.msra.mxu0 0.0
    %1448 = vmatprep.mubr.f32.mxu0 0.0
    %1449 = vmatmul.mubr.f32.gmra.mrb[0].mxu0 %v1373
    %v1450 = vpop.f32.mrb[0].mxu0
    %v1451 = vadd.f32 %v1354, %v1450
    %v1452 = vpop.f32.mrb[0].mxu0
    %1453 = vmatprep.mubr.f32.mxu0 0.0
    %1454 = vmatmul.mubr.f32.gmra.mrb[0].mxu0 %v1376
    %v1455 = vpop.f32.mrb[0].mxu0
    %v1456 = vadd.f32 %v1359, %v1455
    %v1457 = vpop.f32.mrb[0].mxu0
    %1458 = vmatprep.mubr.f32.mxu0 0.0
    %1459 = vmatmul.mubr.f32.gmra.mrb[0].mxu0 %v1379
    %v1460 = vpop.f32.mrb[0].mxu0
    %v1461 = vadd.f32 %v1364, %v1460
    %v1462 = vpop.f32.mrb[0].mxu0
    %1463 = vmatprep.mubr.f32.mxu0 0.0
    %1464 = vmatmul.mubr.f32.gmra.mrb[0].mxu0 %v1382
    %v1465 = vpop.f32.mrb[0].mxu0
    %v1466 = vadd.f32 %v1369, %v1465
    %v1467 = vpop.f32.mrb[0].mxu0
    %1468 = vdwg.mxu0
    %1469 = vst [vmem:[#allocation16] sm:$0xff] %v1451
    %1470 = vst [vmem:[#allocation16 + $0x8] sm:$0xff] %v1456
    %1471 = vst [vmem:[#allocation16 + $0x10] sm:$0xff] %v1461
    %1472 = vst [vmem:[#allocation16 + $0x18] sm:$0xff] %v1466
    // Predicated region
    $region78: #{tpu_custom_call.1} parent=1 // pred_check
      _
    $region79: #{tpu_custom_call.1} parent=1 // pred_check_branch
      %1474 = sbr.rel (0) target = $region81
    $region80: #{tpu_custom_call.1} parent=1 // pred_region
      %s1476 = ssub.s32 512, 512
      %1477 = vsyncadd [#allocation3], %s1476
      %s1478 = sshll.u32 [#allocation16], 4
      %s1479 = int_to_ptr.vmem [resolvable:$true] %s1478
      %1484 = dma.vmem_to_hbm [thread:$0]  %s1479, 512, %s11, [#allocation3], 128, 128, 8
    $region81: #{tpu_custom_call.1} parent=1 // pred_fallthru
      _
    // Predicated region
    $region82: #{tpu_custom_call.1} parent=1 // pred_check
      _
    $region83: #{tpu_custom_call.1} parent=1 // pred_check_branch
      %1486 = sbr.rel (0) target = $region85
    $region84: #{tpu_custom_call.1} parent=1 // pred_region
      %1487 = dma.done [#allocation3], 512
    $region85: #{tpu_custom_call.1} parent=1 // pred_fallthru
      _
    %1488 = vsyncpa [#allocation3], 1
    %1489 = vsyncpa [#allocation4], 1
    %1490 = vsyncpa [#allocation6], 1
    %1491 = vsyncpa [#allocation9], 1
    %1492 = vsyncpa [#allocation12], 1
    %1493 = vsyncpa [#allocation15], 1

</llo_original>
